<compile_context>
chip_gen: v7x
topology: tpu7x:2x2x1
jax: 0.10.0
libtpu: 0.0.40
codegen_flags: <defaults>
</compile_context>

<pallas_src>
import functools

import jax
import jax.numpy as jnp
import numpy as np
from jax.experimental import pallas as pl
from jax.experimental.pallas import tpu as pltpu

NEG_INF = -1e30


def _gat_fused_kernel(x_ref, shared_ref, edstT_ref, slab1_ref, slab2_ref, out_ref,
                      *, n, fin1, h1, c1, h2, c2):
    """Fused 2-layer GATv2 forward (single block, all rank-2 math).

    x_ref       : [N, Fin1]      node features
    shared_ref  : [N*N, 2N+1]    [Edst | Esrc | adj_flat]
                    Edst[i*N+j, i'] = (i == i')   repeat destination rows
                    Esrc[i*N+j, j'] = (j == j')   tile source rows
                    adj_flat[i*N+j] = adj[i, j]   1 iff edge j -> i (incl. self loops)
    edstT_ref   : [N, N*N]       Edst^T (per-destination segment sums)
    slabK_ref   : packed f32 parameter slab of layer K (lane width H*C), rows:
                    [0,Fin)  lin_l W | [Fin,2Fin) lin_r W | lin_l b | lin_r b |
                    H rows block-diag att | H rows head selector | output bias |
                    (layer 2 only) C rows head-mean map
    out_ref     : [N, num_classes]  log-softmax output
    """
    f32 = jnp.float32

    edst = shared_ref[:, 0:n]                      # [NN, N]
    esrc = shared_ref[:, n:2 * n]                  # [NN, N]
    adjf = shared_ref[:, 2 * n:2 * n + 1]          # [NN, 1]
    edstT = edstT_ref[...]                         # [N, NN]

    def mm(a, b):                                  # plain MXU matmul
        return jnp.dot(a, b, preferred_element_type=f32)

    def mm_rt(a, b):                               # a @ b.T (contract minor dims)
        return jax.lax.dot_general(a, b, dimension_numbers=(((1,), (1,)), ((), ())),
                                   preferred_element_type=f32)

    def gatv2(feat, slab_ref, fin, heads, out_ch):
        r = 0
        wl = slab_ref[r:r + fin, :]; r += fin            # [Fin, HC]
        wr = slab_ref[r:r + fin, :]; r += fin            # [Fin, HC]
        bl = slab_ref[r:r + 1, :]; r += 1                # [1, HC]
        br = slab_ref[r:r + 1, :]; r += 1                # [1, HC]
        amapT = slab_ref[r:r + heads, :]; r += heads     # [H, HC] att (block-diag rows)
        hsel = slab_ref[r:r + heads, :]; r += heads      # [H, HC] 0/1 head selector

        xl = mm(feat, wl) + bl                     # [N, HC]   source projection (lin_l)
        xr = mm(feat, wr) + br                     # [N, HC]   destination projection (lin_r)

        # Pairwise slab d[(i,j), k] = xr[i,k] + xl[j,k] via two constant-selection
        # matmuls; one LeakyReLU pass; one block-diag matmul folds the att weights.
        xl_rep = mm(esrc, xl)                      # [NN, HC]  xl[j, k]
        d = mm(edst, xr) + xl_rep                  # [NN, HC]  xr[i, k] + xl[j, k]
        s = jnp.where(d > 0, d, 0.2 * d)           # LeakyReLU(0.2)
        e = mm_rt(s, amapT)                        # [NN, H]   attention logits

        # Masked softmax over source nodes j, batched over (dst, head).
        e = jnp.where(adjf > 0, e, NEG_INF)
        m = jnp.max(e, axis=0, keepdims=True)      # [1, H] per-head shift (constant within
        p = jnp.exp(e - m)                         #        every softmax group -> exact)
        denom = jnp.maximum(mm(edstT, p), 1e-30)   # [N, H] sum_j p (guard all-masked rows)
        alpha = p / mm(edst, denom)                # [NN, H] exact normalization

        # Aggregation: agg[i, h*C+c] = sum_j alpha[i,j,h] * xl[j, h*C+c]
        agg = mm(edstT, mm(alpha, hsel) * xl_rep)  # [N, HC] head-concatenated, lane-dense
        return agg, r

    x = x_ref[...]

    # ---- layer 1: GATv2(concat=True) + bias + ELU ----
    agg1, r1 = gatv2(x, slab1_ref, fin1, h1, c1)
    hid = agg1 + slab1_ref[r1:r1 + 1, :]
    hid = jnp.where(hid > 0, hid, jnp.exp(jnp.minimum(hid, 0.0)) - 1.0)   # safe ELU

    # ---- layer 2: GATv2(concat=False -> head mean) + bias + log_softmax ----
    fin2 = h1 * c1
    agg2, r2 = gatv2(hid, slab2_ref, fin2, h2, c2)
    bias2 = slab2_ref[r2:r2 + 1, 0:c2]             # [1, C2]
    meanT = slab2_ref[r2 + 1:r2 + 1 + c2, :]       # [C2, H2*C2] head-mean map
    o = mm_rt(agg2, meanT) + bias2                 # [N, C2]
    mx = jnp.max(o, axis=1, keepdims=True)
    lse = mx + jnp.log(jnp.sum(jnp.exp(o - mx), axis=1, keepdims=True))
    out_ref[...] = o - lse


def _prep_layer_slab(params, heads, out_ch, with_mean):
    """Pack one GATv2 layer's parameters into a single [rows, H*C] f32 slab."""
    wl, bl, wr, br, att, bias = params
    hc = heads * out_ch
    hsel = jnp.repeat(jnp.eye(heads, dtype=jnp.float32), out_ch, axis=1)    # [H, HC]
    amapT = hsel * att.reshape(1, hc)                                       # block-diag att
    bias_row = jnp.zeros((1, hc), jnp.float32).at[0, :bias.shape[0]].set(bias)
    rows = [wl, wr, bl.reshape(1, hc), br.reshape(1, hc), amapT, hsel, bias_row]
    if with_mean:
        rows.append(jnp.tile(jnp.eye(out_ch, dtype=jnp.float32), (1, heads)) / heads)
    return jnp.concatenate(rows, axis=0).astype(jnp.float32)


@functools.partial(jax.jit, static_argnames=("hid", "in_head", "out_head", "num_classes"))
def gat_forward(x, adj, p_conv1, p_conv2, *, hid=3, in_head=3, out_head=3, num_classes=3):
    n, fin = x.shape
    slab1 = _prep_layer_slab(p_conv1, in_head, hid, with_mean=False)
    slab2 = _prep_layer_slab(p_conv2, out_head, num_classes, with_mean=True)

    # Shared constants (selection matrices + flattened adjacency), packed into one slab.
    eye_n = jnp.eye(n, dtype=jnp.float32)
    edst = jnp.repeat(eye_n, n, axis=0)                        # [NN, N]
    esrc = jnp.tile(eye_n, (n, 1))                             # [NN, N]
    adjf = adj.astype(jnp.float32).reshape(n * n, 1)           # [NN, 1]
    shared = jnp.concatenate([edst, esrc, adjf], axis=1)       # [NN, 2N+1]
    edstT = edst.T                                             # [N, NN]

    kernel = functools.partial(_gat_fused_kernel, n=n, fin1=fin,
                               h1=in_head, c1=hid, h2=out_head, c2=num_classes)
    vmem = pl.BlockSpec(memory_space=pltpu.MemorySpace.VMEM)

    # Single fused call, no grid (whole problem is a few vregs).  See header for the
    # large-N tiling / dimension_semantics / bf16 plan.
    return pl.pallas_call(
        kernel,
        out_shape=jax.ShapeDtypeStruct((n, num_classes), jnp.float32),
        in_specs=[vmem] * 5,
        out_specs=vmem,
    )(x.astype(jnp.float32), shared, edstT, slab1, slab2)


# ----------------------- pure-JAX reference (for checking) -----------------------
def _gatv2_ref(x, adj, params, *, heads, out_ch, concat):
    wl, bl, wr, br, att, bias = params
    n = x.shape[0]
    xl = (x @ wl + bl).reshape(n, heads, out_ch)
    xr = (x @ wr + br).reshape(n, heads, out_ch)
    s = xr[:, None, :, :] + xl[None, :, :, :]          # [i, j, h, c]
    s = jnp.where(s > 0, s, 0.2 * s)
    e = jnp.einsum('ijhc,hc->ijh', s, att)
    e = jnp.where(adj[:, :, None] > 0, e, NEG_INF)
    e = e - jnp.max(e, axis=1, keepdims=True)
    p = jnp.exp(e) * adj[:, :, None]
    alpha = p / jnp.sum(p, axis=1, keepdims=True)
    out = jnp.einsum('ijh,jhc->ihc', alpha, xl)
    if concat:
        return out.reshape(n, heads * out_ch) + bias
    return out.mean(axis=1) + bias


def _gat_ref(x, adj, p1, p2):
    h = _gatv2_ref(x, adj, p1, heads=3, out_ch=3, concat=True)
    h = jnp.where(h > 0, h, jnp.exp(h) - 1.0)
    o = _gatv2_ref(h, adj, p2, heads=3, out_ch=3, concat=False)
    return jax.nn.log_softmax(o, axis=1)


# ------------------------------------ main ------------------------------------
if __name__ == "__main__":
    N, F_IN = 8, 4                  # small graph: 8 nodes, 4 input features
    HID, IN_HEAD, OUT_HEAD, NUM_CLASSES = 3, 3, 3, 3

    key = jax.random.PRNGKey(0)
    ks = jax.random.split(key, 12)

    def glorot(k, shape):
        lim = (6.0 / (shape[0] + shape[-1])) ** 0.5
        return jax.random.uniform(k, shape, jnp.float32, -lim, lim)

    def small(k, shape, s=0.1):
        return jax.random.uniform(k, shape, jnp.float32, -s, s)

    # conv1 = GATv2Conv(F_IN, HID, heads=IN_HEAD, concat=True)
    p_conv1 = (glorot(ks[0], (F_IN, IN_HEAD * HID)),        # lin_l weight
               small(ks[1], (IN_HEAD * HID,)),              # lin_l bias
               glorot(ks[2], (F_IN, IN_HEAD * HID)),        # lin_r weight
               small(ks[3], (IN_HEAD * HID,)),              # lin_r bias
               glorot(ks[4], (IN_HEAD, HID)),               # att
               small(ks[5], (IN_HEAD * HID,)))              # output bias
    # conv2 = GATv2Conv(HID*IN_HEAD, NUM_CLASSES, heads=OUT_HEAD, concat=False)
    p_conv2 = (glorot(ks[6], (IN_HEAD * HID, OUT_HEAD * NUM_CLASSES)),
               small(ks[7], (OUT_HEAD * NUM_CLASSES,)),
               glorot(ks[8], (IN_HEAD * HID, OUT_HEAD * NUM_CLASSES)),
               small(ks[9], (OUT_HEAD * NUM_CLASSES,)),
               glorot(ks[10], (OUT_HEAD, NUM_CLASSES)),
               small(ks[11], (NUM_CLASSES,)))

    # deterministic node features
    x = jax.random.normal(jax.random.PRNGKey(1), (N, F_IN), jnp.float32)

    # deterministic edge_index (2, E): ring in both directions + a few chords
    src = jnp.array([0, 1, 1, 2, 2, 3, 3, 4, 4, 5, 5, 6, 6, 7, 7, 0, 0, 4, 2, 6])
    dst = jnp.array([1, 0, 2, 1, 3, 2, 4, 3, 5, 4, 6, 5, 7, 6, 0, 7, 4, 0, 6, 2])
    adj = jnp.zeros((N, N), jnp.float32)
    adj = adj.at[dst, src].set(1.0)                           # message src -> dst
    adj = adj.at[jnp.arange(N), jnp.arange(N)].set(1.0)       # add_self_loops=True

    out = gat_forward(x, adj, p_conv1, p_conv2,
                      hid=HID, in_head=IN_HEAD, out_head=OUT_HEAD,
                      num_classes=NUM_CLASSES)
    out = jax.block_until_ready(out)
    assert out.shape == (N, NUM_CLASSES)

    ref = jax.block_until_ready(_gat_ref(x, adj, p_conv1, p_conv2))
    # Tolerance tightened vs. previous revision (exact softmax divide now); remaining
    # slack covers MXU f32 matmul accumulation-order differences.
    np.testing.assert_allclose(np.asarray(out), np.asarray(ref),
                               rtol=1e-2, atol=1e-2)

    print("KERNEL_OK")
</pallas_src>

<mosaic_0001>
module attributes {stable_mosaic.version = 11 : i64} {
  func.func @_gat_fused_kernel(%arg0: memref<8x4xf32, #tpu.memory_space<vmem>>, %arg1: memref<64x17xf32, #tpu.memory_space<vmem>>, %arg2: memref<8x64xf32, #tpu.memory_space<vmem>>, %arg3: memref<17x9xf32, #tpu.memory_space<vmem>>, %arg4: memref<30x9xf32, #tpu.memory_space<vmem>>, %arg5: memref<8x3xf32, #tpu.memory_space<vmem>>) attributes {dimension_semantics = [], scalar_prefetch = 0 : i64, scratch_operands = 0 : i64, tpu.core_type = #tpu.core_type<tc>} {
    %c0 = arith.constant 0 : index
    %c0_0 = arith.constant 0 : index
    %0 = vector.load %arg1[%c0, %c0_0] : memref<64x17xf32, #tpu.memory_space<vmem>>, vector<64x8xf32>
    %c0_1 = arith.constant 0 : index
    %c8 = arith.constant 8 : index
    %1 = vector.load %arg1[%c0_1, %c8] : memref<64x17xf32, #tpu.memory_space<vmem>>, vector<64x8xf32>
    %c0_2 = arith.constant 0 : index
    %c16 = arith.constant 16 : index
    %2 = vector.load %arg1[%c0_2, %c16] : memref<64x17xf32, #tpu.memory_space<vmem>>, vector<64x1xf32>
    %c0_3 = arith.constant 0 : index
    %c0_4 = arith.constant 0 : index
    %3 = vector.load %arg2[%c0_3, %c0_4] : memref<8x64xf32, #tpu.memory_space<vmem>>, vector<8x64xf32>
    %c0_5 = arith.constant 0 : index
    %c0_6 = arith.constant 0 : index
    %4 = vector.load %arg0[%c0_5, %c0_6] : memref<8x4xf32, #tpu.memory_space<vmem>>, vector<8x4xf32>
    %c0_7 = arith.constant 0 : index
    %c0_8 = arith.constant 0 : index
    %5 = vector.load %arg3[%c0_7, %c0_8] : memref<17x9xf32, #tpu.memory_space<vmem>>, vector<4x9xf32>
    %c4 = arith.constant 4 : index
    %c0_9 = arith.constant 0 : index
    %6 = vector.load %arg3[%c4, %c0_9] : memref<17x9xf32, #tpu.memory_space<vmem>>, vector<4x9xf32>
    %c8_10 = arith.constant 8 : index
    %c0_11 = arith.constant 0 : index
    %7 = vector.load %arg3[%c8_10, %c0_11] : memref<17x9xf32, #tpu.memory_space<vmem>>, vector<1x9xf32>
    %c9 = arith.constant 9 : index
    %c0_12 = arith.constant 0 : index
    %8 = vector.load %arg3[%c9, %c0_12] : memref<17x9xf32, #tpu.memory_space<vmem>>, vector<1x9xf32>
    %c10 = arith.constant 10 : index
    %c0_13 = arith.constant 0 : index
    %9 = vector.load %arg3[%c10, %c0_13] : memref<17x9xf32, #tpu.memory_space<vmem>>, vector<3x9xf32>
    %c13 = arith.constant 13 : index
    %c0_14 = arith.constant 0 : index
    %10 = vector.load %arg3[%c13, %c0_14] : memref<17x9xf32, #tpu.memory_space<vmem>>, vector<3x9xf32>
    %cst = arith.constant dense<0.000000e+00> : vector<8x9xf32>
    %11 = tpu.matmul %4, %5, %cst {dimension_numbers = #tpu.dot_dimension_numbers<[1], [0], [0], [1], [0, 0, 1, 1], [], []>} : vector<8x4xf32>, vector<4x9xf32>, vector<8x9xf32> -> vector<8x9xf32>
    %12 = vector.broadcast %7 : vector<1x9xf32> to vector<8x9xf32>
    %13 = arith.addf %11, %12 : vector<8x9xf32>
    %cst_15 = arith.constant dense<0.000000e+00> : vector<8x9xf32>
    %14 = tpu.matmul %4, %6, %cst_15 {dimension_numbers = #tpu.dot_dimension_numbers<[1], [0], [0], [1], [0, 0, 1, 1], [], []>} : vector<8x4xf32>, vector<4x9xf32>, vector<8x9xf32> -> vector<8x9xf32>
    %15 = vector.broadcast %8 : vector<1x9xf32> to vector<8x9xf32>
    %16 = arith.addf %14, %15 : vector<8x9xf32>
    %cst_16 = arith.constant dense<0.000000e+00> : vector<64x9xf32>
    %17 = tpu.matmul %1, %13, %cst_16 {dimension_numbers = #tpu.dot_dimension_numbers<[1], [0], [0], [1], [0, 0, 1, 1], [], []>} : vector<64x8xf32>, vector<8x9xf32>, vector<64x9xf32> -> vector<64x9xf32>
    %cst_17 = arith.constant dense<0.000000e+00> : vector<64x9xf32>
    %18 = tpu.matmul %0, %16, %cst_17 {dimension_numbers = #tpu.dot_dimension_numbers<[1], [0], [0], [1], [0, 0, 1, 1], [], []>} : vector<64x8xf32>, vector<8x9xf32>, vector<64x9xf32> -> vector<64x9xf32>
    %19 = arith.addf %18, %17 : vector<64x9xf32>
    %cst_18 = arith.constant 0.000000e+00 : f32
    %20 = vector.broadcast %cst_18 : f32 to vector<64x9xf32>
    %21 = arith.cmpf ogt, %19, %20 : vector<64x9xf32>
    %cst_19 = arith.constant 2.000000e-01 : f32
    %22 = vector.broadcast %cst_19 : f32 to vector<64x9xf32>
    %23 = arith.mulf %22, %19 : vector<64x9xf32>
    %24 = arith.select %21, %19, %23 : vector<64x9xi1>, vector<64x9xf32>
    %cst_20 = arith.constant dense<0.000000e+00> : vector<64x3xf32>
    %25 = tpu.matmul %24, %9, %cst_20 {dimension_numbers = #tpu.dot_dimension_numbers<[1], [1], [0], [0], [0, 0, 1, 0], [], []>} : vector<64x9xf32>, vector<3x9xf32>, vector<64x3xf32> -> vector<64x3xf32>
    %cst_21 = arith.constant 0.000000e+00 : f32
    %26 = vector.broadcast %cst_21 : f32 to vector<64x1xf32>
    %27 = arith.cmpf ogt, %2, %26 : vector<64x1xf32>
    %cst_22 = arith.constant -1.000000e+30 : f32
    %28 = vector.shape_cast %27 : vector<64x1xi1> to vector<64x1xi1>
    %29 = vector.broadcast %28 : vector<64x1xi1> to vector<64x3xi1>
    %30 = vector.broadcast %cst_22 : f32 to vector<64x3xf32>
    %31 = arith.select %29, %25, %30 : vector<64x3xi1>, vector<64x3xf32>
    %cst_23 = arith.constant dense<0xFF800000> : vector<3xf32>
    %32 = vector.multi_reduction <maximumf>, %31, %cst_23 [0] : vector<64x3xf32> to vector<3xf32>
    %33 = vector.shape_cast %32 : vector<3xf32> to vector<1x3xf32>
    %34 = vector.broadcast %33 : vector<1x3xf32> to vector<64x3xf32>
    %35 = arith.subf %31, %34 : vector<64x3xf32>
    %36 = math.exp %35 : vector<64x3xf32>
    %cst_24 = arith.constant dense<0.000000e+00> : vector<8x3xf32>
    %37 = tpu.matmul %3, %36, %cst_24 {dimension_numbers = #tpu.dot_dimension_numbers<[1], [0], [0], [1], [0, 0, 1, 1], [], []>} : vector<8x64xf32>, vector<64x3xf32>, vector<8x3xf32> -> vector<8x3xf32>
    %cst_25 = arith.constant 1.000000e-30 : f32
    %38 = vector.broadcast %cst_25 : f32 to vector<8x3xf32>
    %39 = arith.maximumf %37, %38 : vector<8x3xf32>
    %cst_26 = arith.constant dense<0.000000e+00> : vector<64x3xf32>
    %40 = tpu.matmul %0, %39, %cst_26 {dimension_numbers = #tpu.dot_dimension_numbers<[1], [0], [0], [1], [0, 0, 1, 1], [], []>} : vector<64x8xf32>, vector<8x3xf32>, vector<64x3xf32> -> vector<64x3xf32>
    %41 = arith.divf %36, %40 : vector<64x3xf32>
    %cst_27 = arith.constant dense<0.000000e+00> : vector<64x9xf32>
    %42 = tpu.matmul %41, %10, %cst_27 {dimension_numbers = #tpu.dot_dimension_numbers<[1], [0], [0], [1], [0, 0, 1, 1], [], []>} : vector<64x3xf32>, vector<3x9xf32>, vector<64x9xf32> -> vector<64x9xf32>
    %43 = arith.mulf %42, %17 : vector<64x9xf32>
    %cst_28 = arith.constant dense<0.000000e+00> : vector<8x9xf32>
    %44 = tpu.matmul %3, %43, %cst_28 {dimension_numbers = #tpu.dot_dimension_numbers<[1], [0], [0], [1], [0, 0, 1, 1], [], []>} : vector<8x64xf32>, vector<64x9xf32>, vector<8x9xf32> -> vector<8x9xf32>
    %c16_29 = arith.constant 16 : index
    %c0_30 = arith.constant 0 : index
    %45 = vector.load %arg3[%c16_29, %c0_30] : memref<17x9xf32, #tpu.memory_space<vmem>>, vector<1x9xf32>
    %46 = vector.broadcast %45 : vector<1x9xf32> to vector<8x9xf32>
    %47 = arith.addf %44, %46 : vector<8x9xf32>
    %cst_31 = arith.constant 0.000000e+00 : f32
    %48 = vector.broadcast %cst_31 : f32 to vector<8x9xf32>
    %49 = arith.cmpf ogt, %47, %48 : vector<8x9xf32>
    %cst_32 = arith.constant 0.000000e+00 : f32
    %50 = vector.broadcast %cst_32 : f32 to vector<8x9xf32>
    %51 = arith.minimumf %47, %50 : vector<8x9xf32>
    %52 = math.exp %51 : vector<8x9xf32>
    %cst_33 = arith.constant 1.000000e+00 : f32
    %53 = vector.broadcast %cst_33 : f32 to vector<8x9xf32>
    %54 = arith.subf %52, %53 : vector<8x9xf32>
    %55 = arith.select %49, %47, %54 : vector<8x9xi1>, vector<8x9xf32>
    %c0_34 = arith.constant 0 : index
    %c0_35 = arith.constant 0 : index
    %56 = vector.load %arg4[%c0_34, %c0_35] : memref<30x9xf32, #tpu.memory_space<vmem>>, vector<9x9xf32>
    %c9_36 = arith.constant 9 : index
    %c0_37 = arith.constant 0 : index
    %57 = vector.load %arg4[%c9_36, %c0_37] : memref<30x9xf32, #tpu.memory_space<vmem>>, vector<9x9xf32>
    %c18 = arith.constant 18 : index
    %c0_38 = arith.constant 0 : index
    %58 = vector.load %arg4[%c18, %c0_38] : memref<30x9xf32, #tpu.memory_space<vmem>>, vector<1x9xf32>
    %c19 = arith.constant 19 : index
    %c0_39 = arith.constant 0 : index
    %59 = vector.load %arg4[%c19, %c0_39] : memref<30x9xf32, #tpu.memory_space<vmem>>, vector<1x9xf32>
    %c20 = arith.constant 20 : index
    %c0_40 = arith.constant 0 : index
    %60 = vector.load %arg4[%c20, %c0_40] : memref<30x9xf32, #tpu.memory_space<vmem>>, vector<3x9xf32>
    %c23 = arith.constant 23 : index
    %c0_41 = arith.constant 0 : index
    %61 = vector.load %arg4[%c23, %c0_41] : memref<30x9xf32, #tpu.memory_space<vmem>>, vector<3x9xf32>
    %cst_42 = arith.constant dense<0.000000e+00> : vector<8x9xf32>
    %62 = tpu.matmul %55, %56, %cst_42 {dimension_numbers = #tpu.dot_dimension_numbers<[1], [0], [0], [1], [0, 0, 1, 1], [], []>} : vector<8x9xf32>, vector<9x9xf32>, vector<8x9xf32> -> vector<8x9xf32>
    %63 = vector.broadcast %58 : vector<1x9xf32> to vector<8x9xf32>
    %64 = arith.addf %62, %63 : vector<8x9xf32>
    %cst_43 = arith.constant dense<0.000000e+00> : vector<8x9xf32>
    %65 = tpu.matmul %55, %57, %cst_43 {dimension_numbers = #tpu.dot_dimension_numbers<[1], [0], [0], [1], [0, 0, 1, 1], [], []>} : vector<8x9xf32>, vector<9x9xf32>, vector<8x9xf32> -> vector<8x9xf32>
    %66 = vector.broadcast %59 : vector<1x9xf32> to vector<8x9xf32>
    %67 = arith.addf %65, %66 : vector<8x9xf32>
    %cst_44 = arith.constant dense<0.000000e+00> : vector<64x9xf32>
    %68 = tpu.matmul %1, %64, %cst_44 {dimension_numbers = #tpu.dot_dimension_numbers<[1], [0], [0], [1], [0, 0, 1, 1], [], []>} : vector<64x8xf32>, vector<8x9xf32>, vector<64x9xf32> -> vector<64x9xf32>
    %cst_45 = arith.constant dense<0.000000e+00> : vector<64x9xf32>
    %69 = tpu.matmul %0, %67, %cst_45 {dimension_numbers = #tpu.dot_dimension_numbers<[1], [0], [0], [1], [0, 0, 1, 1], [], []>} : vector<64x8xf32>, vector<8x9xf32>, vector<64x9xf32> -> vector<64x9xf32>
    %70 = arith.addf %69, %68 : vector<64x9xf32>
    %cst_46 = arith.constant 0.000000e+00 : f32
    %71 = vector.broadcast %cst_46 : f32 to vector<64x9xf32>
    %72 = arith.cmpf ogt, %70, %71 : vector<64x9xf32>
    %cst_47 = arith.constant 2.000000e-01 : f32
    %73 = vector.broadcast %cst_47 : f32 to vector<64x9xf32>
    %74 = arith.mulf %73, %70 : vector<64x9xf32>
    %75 = arith.select %72, %70, %74 : vector<64x9xi1>, vector<64x9xf32>
    %cst_48 = arith.constant dense<0.000000e+00> : vector<64x3xf32>
    %76 = tpu.matmul %75, %60, %cst_48 {dimension_numbers = #tpu.dot_dimension_numbers<[1], [1], [0], [0], [0, 0, 1, 0], [], []>} : vector<64x9xf32>, vector<3x9xf32>, vector<64x3xf32> -> vector<64x3xf32>
    %cst_49 = arith.constant 0.000000e+00 : f32
    %77 = vector.broadcast %cst_49 : f32 to vector<64x1xf32>
    %78 = arith.cmpf ogt, %2, %77 : vector<64x1xf32>
    %cst_50 = arith.constant -1.000000e+30 : f32
    %79 = vector.shape_cast %78 : vector<64x1xi1> to vector<64x1xi1>
    %80 = vector.broadcast %79 : vector<64x1xi1> to vector<64x3xi1>
    %81 = vector.broadcast %cst_50 : f32 to vector<64x3xf32>
    %82 = arith.select %80, %76, %81 : vector<64x3xi1>, vector<64x3xf32>
    %cst_51 = arith.constant dense<0xFF800000> : vector<3xf32>
    %83 = vector.multi_reduction <maximumf>, %82, %cst_51 [0] : vector<64x3xf32> to vector<3xf32>
    %84 = vector.shape_cast %83 : vector<3xf32> to vector<1x3xf32>
    %85 = vector.broadcast %84 : vector<1x3xf32> to vector<64x3xf32>
    %86 = arith.subf %82, %85 : vector<64x3xf32>
    %87 = math.exp %86 : vector<64x3xf32>
    %cst_52 = arith.constant dense<0.000000e+00> : vector<8x3xf32>
    %88 = tpu.matmul %3, %87, %cst_52 {dimension_numbers = #tpu.dot_dimension_numbers<[1], [0], [0], [1], [0, 0, 1, 1], [], []>} : vector<8x64xf32>, vector<64x3xf32>, vector<8x3xf32> -> vector<8x3xf32>
    %cst_53 = arith.constant 1.000000e-30 : f32
    %89 = vector.broadcast %cst_53 : f32 to vector<8x3xf32>
    %90 = arith.maximumf %88, %89 : vector<8x3xf32>
    %cst_54 = arith.constant dense<0.000000e+00> : vector<64x3xf32>
    %91 = tpu.matmul %0, %90, %cst_54 {dimension_numbers = #tpu.dot_dimension_numbers<[1], [0], [0], [1], [0, 0, 1, 1], [], []>} : vector<64x8xf32>, vector<8x3xf32>, vector<64x3xf32> -> vector<64x3xf32>
    %92 = arith.divf %87, %91 : vector<64x3xf32>
    %cst_55 = arith.constant dense<0.000000e+00> : vector<64x9xf32>
    %93 = tpu.matmul %92, %61, %cst_55 {dimension_numbers = #tpu.dot_dimension_numbers<[1], [0], [0], [1], [0, 0, 1, 1], [], []>} : vector<64x3xf32>, vector<3x9xf32>, vector<64x9xf32> -> vector<64x9xf32>
    %94 = arith.mulf %93, %68 : vector<64x9xf32>
    %cst_56 = arith.constant dense<0.000000e+00> : vector<8x9xf32>
    %95 = tpu.matmul %3, %94, %cst_56 {dimension_numbers = #tpu.dot_dimension_numbers<[1], [0], [0], [1], [0, 0, 1, 1], [], []>} : vector<8x64xf32>, vector<64x9xf32>, vector<8x9xf32> -> vector<8x9xf32>
    %c26 = arith.constant 26 : index
    %c0_57 = arith.constant 0 : index
    %96 = vector.load %arg4[%c26, %c0_57] : memref<30x9xf32, #tpu.memory_space<vmem>>, vector<1x3xf32>
    %c27 = arith.constant 27 : index
    %c0_58 = arith.constant 0 : index
    %97 = vector.load %arg4[%c27, %c0_58] : memref<30x9xf32, #tpu.memory_space<vmem>>, vector<3x9xf32>
    %cst_59 = arith.constant dense<0.000000e+00> : vector<8x3xf32>
    %98 = tpu.matmul %95, %97, %cst_59 {dimension_numbers = #tpu.dot_dimension_numbers<[1], [1], [0], [0], [0, 0, 1, 0], [], []>} : vector<8x9xf32>, vector<3x9xf32>, vector<8x3xf32> -> vector<8x3xf32>
    %99 = vector.broadcast %96 : vector<1x3xf32> to vector<8x3xf32>
    %100 = arith.addf %98, %99 : vector<8x3xf32>
    %cst_60 = arith.constant dense<0xFF800000> : vector<8xf32>
    %101 = vector.multi_reduction <maximumf>, %100, %cst_60 [1] : vector<8x3xf32> to vector<8xf32>
    %102 = vector.shape_cast %101 : vector<8xf32> to vector<8x1xf32>
    %103 = vector.broadcast %102 : vector<8x1xf32> to vector<8x3xf32>
    %104 = arith.subf %100, %103 : vector<8x3xf32>
    %105 = math.exp %104 : vector<8x3xf32>
    %cst_61 = arith.constant dense<0.000000e+00> : vector<8xf32>
    %106 = vector.multi_reduction <add>, %105, %cst_61 [1] : vector<8x3xf32> to vector<8xf32>
    %107 = vector.shape_cast %106 : vector<8xf32> to vector<8x1xf32>
    %108 = math.log %107 : vector<8x1xf32>
    %109 = arith.addf %102, %108 : vector<8x1xf32>
    %110 = vector.broadcast %109 : vector<8x1xf32> to vector<8x3xf32>
    %111 = arith.subf %100, %110 : vector<8x3xf32>
    %c0_62 = arith.constant 0 : index
    %c0_63 = arith.constant 0 : index
    %112 = vector.load %arg5[%c0_62, %c0_63] : memref<8x3xf32, #tpu.memory_space<vmem>>, vector<8x3xf32>
    tpu.vector_store %arg5[%c0_62, %c0_63], %111 {strides = array<i32>} : memref<8x3xf32, #tpu.memory_space<vmem>>, vector<8x3xf32>,
    return
  }
}

</mosaic_0001>

<llo_original>
// kernel: tile.19
$region0: #{tile.19}
  %s0 = inlined_call_operand.vmem [shape: f32[8,8,8], index: 0, kind: input, shape index: {}]
  %s1 = inlined_call_operand.vmem [shape: f32[64,8], index: 1, kind: output, shape index: {}]
  %v2 = vld [vmem:[%s0] ss:$8 sm:$0xf]
  %v3 = vld [vmem:[%s0] ss:$8 sm:$0xf0]
  %vm4 = vcmask 1047556
  %v5 = vsel %vm4, %v3, %v2
  %vm6 = vcmask 64512
  %7 = vst.msk [vmem:[%s1] sm:$0xff] %vm6, %v5
  %s8 = scalar_lea.vmem %s0, 7
  %v9 = vld [vmem:[%s8] ss:$8 sm:$0xf]
  %s10 = scalar_lea.vmem %s0, 7
  %v11 = vld [vmem:[%s10] ss:$8 sm:$0xf0]
  %vm12 = vcmask 1047556
  %v13 = vsel %vm12, %v11, %v9
  %14 = vrot.lane.b32.xlu0 %v13, 56
  %v15 = vpop.permute.xlu0 %14
  %vm16 = vcmask 523712
  %17 = vst.msk [vmem:[%s1] sm:$0xff] %vm16, %v15
  %s18 = scalar_lea.vmem %s0, 6
  %v19 = vld [vmem:[%s18] ss:$8 sm:$0xf]
  %s20 = scalar_lea.vmem %s0, 6
  %v21 = vld [vmem:[%s20] ss:$8 sm:$0xf0]
  %vm22 = vcmask 1047556
  %v23 = vsel %vm22, %v21, %v19
  %24 = vrot.lane.b32.xlu0 %v23, 48
  %v25 = vpop.permute.xlu0 %24
  %vm26 = vcmask 458112
  %27 = vst.msk [vmem:[%s1] sm:$0xff] %vm26, %v25
  %s28 = scalar_lea.vmem %s0, 5
  %v29 = vld [vmem:[%s28] ss:$8 sm:$0xf]
  %s30 = scalar_lea.vmem %s0, 5
  %v31 = vld [vmem:[%s30] ss:$8 sm:$0xf0]
  %vm32 = vcmask 1047556
  %v33 = vsel %vm32, %v31, %v29
  %34 = vrot.lane.b32.xlu0 %v33, 40
  %v35 = vpop.permute.xlu0 %34
  %vm36 = vcmask 392512
  %37 = vst.msk [vmem:[%s1] sm:$0xff] %vm36, %v35
  %s38 = scalar_lea.vmem %s0, 4
  %v39 = vld [vmem:[%s38] ss:$8 sm:$0xf]
  %s40 = scalar_lea.vmem %s0, 4
  %v41 = vld [vmem:[%s40] ss:$8 sm:$0xf0]
  %vm42 = vcmask 1047556
  %v43 = vsel %vm42, %v41, %v39
  %44 = vrot.lane.b32.xlu0 %v43, 32
  %v45 = vpop.permute.xlu0 %44
  %vm46 = vcmask 326912
  %47 = vst.msk [vmem:[%s1] sm:$0xff] %vm46, %v45
  %s48 = scalar_lea.vmem %s0, 3
  %v49 = vld [vmem:[%s48] ss:$8 sm:$0xf]
  %s50 = scalar_lea.vmem %s0, 3
  %v51 = vld [vmem:[%s50] ss:$8 sm:$0xf0]
  %vm52 = vcmask 1047556
  %v53 = vsel %vm52, %v51, %v49
  %54 = vrot.lane.b32.xlu0 %v53, 24
  %v55 = vpop.permute.xlu0 %54
  %vm56 = vcmask 261312
  %57 = vst.msk [vmem:[%s1] sm:$0xff] %vm56, %v55
  %s58 = scalar_lea.vmem %s0, 2
  %v59 = vld [vmem:[%s58] ss:$8 sm:$0xf]
  %s60 = scalar_lea.vmem %s0, 2
  %v61 = vld [vmem:[%s60] ss:$8 sm:$0xf0]
  %vm62 = vcmask 1047556
  %v63 = vsel %vm62, %v61, %v59
  %64 = vrot.lane.b32.xlu0 %v63, 16
  %v65 = vpop.permute.xlu0 %64
  %vm66 = vcmask 195712
  %67 = vst.msk [vmem:[%s1] sm:$0xff] %vm66, %v65
  %s68 = scalar_lea.vmem %s0, 1
  %v69 = vld [vmem:[%s68] ss:$8 sm:$0xf]
  %s70 = scalar_lea.vmem %s0, 1
  %v71 = vld [vmem:[%s70] ss:$8 sm:$0xf0]
  %vm72 = vcmask 1047556
  %v73 = vsel %vm72, %v71, %v69
  %74 = vrot.lane.b32.xlu0 %v73, 8
  %v75 = vpop.permute.xlu0 %74
  %vm76 = vcmask 130112
  %77 = vst.msk [vmem:[%s1] sm:$0xff] %vm76, %v75

// kernel: mul.13
$region0: #{mul.13}
  %s0 = inlined_call_operand.vmem [shape: f32[3,3], index: 0, kind: input, shape index: {}]
  %s1 = inlined_call_operand.vmem [shape: f32[9], index: 1, kind: output, shape index: {}]
  $region1: #{mul.13} parent=0
    #allocation0 [shape = 'u8[4096]{0}', space=vmem, size = 0x1000, scoped, tag = 'scoped mem for output reshape']
    #allocation1 [shape = 'u8[4096]{0}', space=vmem, size = 0x1000, scoped, tag = 'scoped mem for input reshape']
    %s3 = sshllo.u32 0, 4
    %v4 = vld [vmem:[%s0] sm:%s3]
    %5 = vst [vmem:[#allocation1] sm:%s3] %v4
    %v6 = vld [vmem:[#allocation1] sm:$0x1]
    %vm7 = vcmask 23552
    %8 = vst.msk [vmem:[#allocation0] sm:$0x1] %vm7, %v6
    %s9 = scalar_lea.vmem [#allocation1], 2
    %v10 = vld [vmem:[%s9] sm:$0x1]
    %11 = vrot.lane.b32.xlu0 %v10, 6
    %v12 = vpop.permute.xlu0 %11
    %vm13 = vcmask 72752
    %14 = vst.msk [vmem:[#allocation0] sm:$0x1] %vm13, %v12
    %s15 = scalar_lea.vmem [#allocation1], 1
    %v16 = vld [vmem:[%s15] sm:$0x1]
    %17 = vrot.lane.b32.xlu0 %v16, 3
    %v18 = vpop.permute.xlu0 %17
    %vm19 = vcmask 48152
    %20 = vst.msk [vmem:[#allocation0] sm:$0x1] %vm19, %v18
    %s22 = sshllo.u32 0, 1
    %v24 = vld [vmem:[#allocation0] sm:%s22]
    %s25 = sshllo.u32 0, 1
    %26 = vst [vmem:[%s1] sm:%s25] %v24

// kernel: gat_forward.1
$region0: #{gat_forward.1}
  #allocation0 [shape = 'u32[]', space=smem, size = 0x4, offset = 0x4, fixed_abs, tag = 'smem constant byte address 0x4 - core index']
  #allocation1 [shape = 'u32[144,128]{1,0:T(1,128)}', space=vmem, size = 0x12000, scoped, tag = 'internal scratch']
  %s0 = inlined_call_operand.vmem [shape: f32[8,4], index: 0, kind: input, shape index: {}]
  %s1 = inlined_call_operand.vmem [shape: f32[64,17], index: 1, kind: input, shape index: {}]
  %s2 = inlined_call_operand.vmem [shape: f32[8,64], index: 2, kind: input, shape index: {}]
  %s3 = inlined_call_operand.vmem [shape: f32[17,9], index: 3, kind: input, shape index: {}]
  %s4 = inlined_call_operand.vmem [shape: f32[30,9], index: 4, kind: input, shape index: {}]
  %s5 = inlined_call_operand.vmem [shape: f32[8,3], index: 5, kind: output, shape index: {}]
  %s6 = sld [smem:[#allocation0]]
  $region30: #{gat_forward.1} parent=0
    _
  %s8 = ssub.s32 1, %s6
  %s9 = scalar_select 0, %s8, %s6
  // Predicated region
  $region2: #{gat_forward.1} parent=0 // pred_check
    _
  $region3: #{gat_forward.1} parent=0 // pred_check_branch
    %11 = sbr.rel (0) target = $region5
  $region4: #{gat_forward.1} parent=0 // pred_region
    _
  $region5: #{gat_forward.1} parent=0 // pred_fallthru
    _
  // Predicated region
  $region6: #{gat_forward.1} parent=0 // pred_check
    _
  $region7: #{gat_forward.1} parent=0 // pred_check_branch
    %13 = sbr.rel (0) target = $region9
  $region8: #{gat_forward.1} parent=0 // pred_region
    _
  $region9: #{gat_forward.1} parent=0 // pred_fallthru
    _
  // Predicated region
  $region10: #{gat_forward.1} parent=0 // pred_check
    _
  $region11: #{gat_forward.1} parent=0 // pred_check_branch
    %15 = sbr.rel (0) target = $region13
  $region12: #{gat_forward.1} parent=0 // pred_region
    _
  $region13: #{gat_forward.1} parent=0 // pred_fallthru
    _
  // Predicated region
  $region14: #{gat_forward.1} parent=0 // pred_check
    _
  $region15: #{gat_forward.1} parent=0 // pred_check_branch
    %17 = sbr.rel (0) target = $region17
  $region16: #{gat_forward.1} parent=0 // pred_region
    _
  $region17: #{gat_forward.1} parent=0 // pred_fallthru
    _
  // Predicated region
  $region18: #{gat_forward.1} parent=0 // pred_check
    _
  $region19: #{gat_forward.1} parent=0 // pred_check_branch
    %19 = sbr.rel (0) target = $region21
  $region20: #{gat_forward.1} parent=0 // pred_region
    _
  $region21: #{gat_forward.1} parent=0 // pred_fallthru
    _
  %v20 = vld [vmem:[%s1] sm:$0xff]
  %v21 = vld [vmem:[%s1 + $0x8] sm:$0xff]
  %v22 = vld [vmem:[%s1 + $0x10] sm:$0xff]
  %v23 = vld [vmem:[%s1 + $0x18] sm:$0xff]
  %v24 = vld [vmem:[%s1 + $0x20] sm:$0xff]
  %v25 = vld [vmem:[%s1 + $0x28] sm:$0xff]
  %v26 = vld [vmem:[%s1 + $0x30] sm:$0xff]
  %v27 = vld [vmem:[%s1 + $0x38] sm:$0xff]
  %v28 = vld [vmem:[%s2] sm:$0xff]
  %v29 = vld [vmem:[%s0] sm:$0xff]
  %v30 = vld [vmem:[%s3] sm:$0xf]
  %v31 = vld [vmem:[%s3 + $0x4] sm:$0xf]
  %v32 = vld [vmem:[%s3 + $0x8] sm:$0x1]
  %v33 = vld [vmem:[%s3 + $0x9] sm:$0x1]
  %v34 = vld [vmem:[%s3 + $0xa] sm:$0x7]
  %v35 = vld [vmem:[%s3 + $0xd] sm:$0x7]
  %v36 = vlaneseq
  %v37 = vshrl.u32 %v36, 7
  %v38 = vsub.s32 0, %v37
  %v39 = vrot.slane %v32, %v38
  %vm40 = vcmask 31744
  %v42 = vsel %vm40, %v29, 0
  %vm44 = vcmask 1043456
  %v46 = vsel %vm44, %v30, 0
  %48 = vmatprep.subr.mxu0 0.0
  %49 = vmatpush1.msra.mxu0 %v46
  %50 = vmatprep.subr.mxu0 0.0
  %51 = vmatpush1.msra.mxu0 0.0
  %52 = vmatprep.subr.mxu0 0.0
  %53 = vmatpush1.msra.mxu0 0.0
  %54 = vmatprep.subr.mxu0 0.0
  %55 = vmatpush1.msra.mxu0 0.0
  %56 = vmatprep.subr.mxu0 0.0
  %57 = vmatpush1.msra.mxu0 0.0
  %58 = vmatprep.subr.mxu0 0.0
  %59 = vmatpush1.msra.mxu0 0.0
  %60 = vmatprep.subr.mxu0 0.0
  %61 = vmatpush1.msra.mxu0 0.0
  %62 = vmatprep.subr.mxu0 0.0
  %63 = vmatpush1.msra.mxu0 0.0
  %64 = vmatprep.subr.mxu0 0.0
  %65 = vmatpush1.msra.mxu0 0.0
  %66 = vmatprep.subr.mxu0 0.0
  %67 = vmatpush1.msra.mxu0 0.0
  %68 = vmatprep.subr.mxu0 0.0
  %69 = vmatpush1.msra.mxu0 0.0
  %70 = vmatprep.subr.mxu0 0.0
  %71 = vmatpush1.msra.mxu0 0.0
  %72 = vmatprep.subr.mxu0 0.0
  %73 = vmatpush1.msra.mxu0 0.0
  %74 = vmatprep.subr.mxu0 0.0
  %75 = vmatpush1.msra.mxu0 0.0
  %76 = vmatprep.subr.mxu0 0.0
  %77 = vmatpush1.msra.mxu0 0.0
  %78 = vmatprep.subr.mxu0 0.0
  %79 = vmatpush1.msra.mxu0 0.0
  %80 = vmatprep.subr.mxu0 0.0
  %81 = vmatpush1.msra.mxu0 0.0
  %82 = vmatprep.subr.mxu0 0.0
  %83 = vmatpush1.msra.mxu0 0.0
  %84 = vmatprep.subr.mxu0 0.0
  %85 = vmatpush1.msra.mxu0 0.0
  %86 = vmatprep.subr.mxu0 0.0
  %87 = vmatpush1.msra.mxu0 0.0
  %88 = vmatprep.subr.mxu0 0.0
  %89 = vmatpush1.msra.mxu0 0.0
  %90 = vmatprep.subr.mxu0 0.0
  %91 = vmatpush1.msra.mxu0 0.0
  %92 = vmatprep.subr.mxu0 0.0
  %93 = vmatpush1.msra.mxu0 0.0
  %94 = vmatprep.subr.mxu0 0.0
  %95 = vmatpush1.msra.mxu0 0.0
  %96 = vmatprep.subr.mxu0 0.0
  %97 = vmatpush1.msra.mxu0 0.0
  %98 = vmatprep.subr.mxu0 0.0
  %99 = vmatpush1.msra.mxu0 0.0
  %100 = vmatprep.subr.mxu0 0.0
  %101 = vmatpush1.msra.mxu0 0.0
  %102 = vmatprep.subr.mxu0 0.0
  %103 = vmatpush1.msra.mxu0 0.0
  %104 = vmatprep.subr.mxu0 0.0
  %105 = vmatpush1.msra.mxu0 0.0
  %106 = vmatprep.subr.mxu0 0.0
  %107 = vmatpush1.msra.mxu0 0.0
  %108 = vmatprep.subr.mxu0 0.0
  %109 = vmatpush1.msra.mxu0 0.0
  %110 = vmatprep.subr.mxu0 0.0
  %111 = vmatpush1.msra.mxu0 0.0
  %112 = vmatprep.mubr.f32.mxu0 0.0
  %113 = vmatmul.mubr.f32.gmra.mrb[0].mxu0 %v42
  %v114 = vpop.f32.mrb[0].mxu0
  %v115 = vadd.f32 %v39, %v114
  %v116 = vpop.f32.mrb[0].mxu0
  %117 = vdwg.mxu0
  %v118 = vlaneseq
  %v119 = vshrl.u32 %v118, 7
  %v120 = vsub.s32 0, %v119
  %v121 = vrot.slane %v33, %v120
  %v123 = vsel %vm44, %v31, 0
  %125 = vmatprep.subr.mxu0 0.0
  %126 = vmatpush1.msra.mxu0 %v123
  %127 = vmatprep.subr.mxu0 0.0
  %128 = vmatpush1.msra.mxu0 0.0
  %129 = vmatprep.subr.mxu0 0.0
  %130 = vmatpush1.msra.mxu0 0.0
  %131 = vmatprep.subr.mxu0 0.0
  %132 = vmatpush1.msra.mxu0 0.0
  %133 = vmatprep.subr.mxu0 0.0
  %134 = vmatpush1.msra.mxu0 0.0
  %135 = vmatprep.subr.mxu0 0.0
  %136 = vmatpush1.msra.mxu0 0.0
  %137 = vmatprep.subr.mxu0 0.0
  %138 = vmatpush1.msra.mxu0 0.0
  %139 = vmatprep.subr.mxu0 0.0
  %140 = vmatpush1.msra.mxu0 0.0
  %141 = vmatprep.subr.mxu0 0.0
  %142 = vmatpush1.msra.mxu0 0.0
  %143 = vmatprep.subr.mxu0 0.0
  %144 = vmatpush1.msra.mxu0 0.0
  %145 = vmatprep.subr.mxu0 0.0
  %146 = vmatpush1.msra.mxu0 0.0
  %147 = vmatprep.subr.mxu0 0.0
  %148 = vmatpush1.msra.mxu0 0.0
  %149 = vmatprep.subr.mxu0 0.0
  %150 = vmatpush1.msra.mxu0 0.0
  %151 = vmatprep.subr.mxu0 0.0
  %152 = vmatpush1.msra.mxu0 0.0
  %153 = vmatprep.subr.mxu0 0.0
  %154 = vmatpush1.msra.mxu0 0.0
  %155 = vmatprep.subr.mxu0 0.0
  %156 = vmatpush1.msra.mxu0 0.0
  %157 = vmatprep.subr.mxu0 0.0
  %158 = vmatpush1.msra.mxu0 0.0
  %159 = vmatprep.subr.mxu0 0.0
  %160 = vmatpush1.msra.mxu0 0.0
  %161 = vmatprep.subr.mxu0 0.0
  %162 = vmatpush1.msra.mxu0 0.0
  %163 = vmatprep.subr.mxu0 0.0
  %164 = vmatpush1.msra.mxu0 0.0
  %165 = vmatprep.subr.mxu0 0.0
  %166 = vmatpush1.msra.mxu0 0.0
  %167 = vmatprep.subr.mxu0 0.0
  %168 = vmatpush1.msra.mxu0 0.0
  %169 = vmatprep.subr.mxu0 0.0
  %170 = vmatpush1.msra.mxu0 0.0
  %171 = vmatprep.subr.mxu0 0.0
  %172 = vmatpush1.msra.mxu0 0.0
  %173 = vmatprep.subr.mxu0 0.0
  %174 = vmatpush1.msra.mxu0 0.0
  %175 = vmatprep.subr.mxu0 0.0
  %176 = vmatpush1.msra.mxu0 0.0
  %177 = vmatprep.subr.mxu0 0.0
  %178 = vmatpush1.msra.mxu0 0.0
  %179 = vmatprep.subr.mxu0 0.0
  %180 = vmatpush1.msra.mxu0 0.0
  %181 = vmatprep.subr.mxu0 0.0
  %182 = vmatpush1.msra.mxu0 0.0
  %183 = vmatprep.subr.mxu0 0.0
  %184 = vmatpush1.msra.mxu0 0.0
  %185 = vmatprep.subr.mxu0 0.0
  %186 = vmatpush1.msra.mxu0 0.0
  %187 = vmatprep.subr.mxu0 0.0
  %188 = vmatpush1.msra.mxu0 0.0
  %189 = vmatprep.mubr.f32.mxu0 0.0
  %190 = vmatmul.mubr.f32.gmra.mrb[0].mxu0 %v42
  %v191 = vpop.f32.mrb[0].mxu0
  %v192 = vadd.f32 %v121, %v191
  %v193 = vpop.f32.mrb[0].mxu0
  %194 = vdwg.mxu0
  %203 = vrot.lane.b32.xlu0 %v20, 120
  %v204 = vpop.permute.xlu0 %203
  %205 = vrot.lane.b32.xlu0 %v21, 120
  %v206 = vpop.permute.xlu0 %205
  %207 = vrot.lane.b32.xlu0 %v22, 120
  %v208 = vpop.permute.xlu0 %207
  %209 = vrot.lane.b32.xlu0 %v23, 120
  %v210 = vpop.permute.xlu0 %209
  %211 = vrot.lane.b32.xlu0 %v24, 120
  %v212 = vpop.permute.xlu0 %211
  %213 = vrot.lane.b32.xlu0 %v25, 120
  %v214 = vpop.permute.xlu0 %213
  %215 = vrot.lane.b32.xlu0 %v26, 120
  %v216 = vpop.permute.xlu0 %215
  %217 = vrot.lane.b32.xlu0 %v27, 120
  %v218 = vpop.permute.xlu0 %217
  %vm219 = vcmask 64512
  %v220 = vsel %vm219, %v204, 0
  %v222 = vsel %vm219, %v206, 0
  %v224 = vsel %vm219, %v208, 0
  %v226 = vsel %vm219, %v210, 0
  %v228 = vsel %vm219, %v212, 0
  %v230 = vsel %vm219, %v214, 0
  %v232 = vsel %vm219, %v216, 0
  %v234 = vsel %vm219, %v218, 0
  %236 = vmatprep.subr.mxu0 0.0
  %237 = vmatpush1.msra.mxu0 %v115
  %238 = vmatprep.subr.mxu0 0.0
  %239 = vmatpush1.msra.mxu0 0.0
  %240 = vmatprep.subr.mxu0 0.0
  %241 = vmatpush1.msra.mxu0 0.0
  %242 = vmatprep.subr.mxu0 0.0
  %243 = vmatpush1.msra.mxu0 0.0
  %244 = vmatprep.subr.mxu0 0.0
  %245 = vmatpush1.msra.mxu0 0.0
  %246 = vmatprep.subr.mxu0 0.0
  %247 = vmatpush1.msra.mxu0 0.0
  %248 = vmatprep.subr.mxu0 0.0
  %249 = vmatpush1.msra.mxu0 0.0
  %250 = vmatprep.subr.mxu0 0.0
  %251 = vmatpush1.msra.mxu0 0.0
  %252 = vmatprep.subr.mxu0 0.0
  %253 = vmatpush1.msra.mxu0 0.0
  %254 = vmatprep.subr.mxu0 0.0
  %255 = vmatpush1.msra.mxu0 0.0
  %256 = vmatprep.subr.mxu0 0.0
  %257 = vmatpush1.msra.mxu0 0.0
  %258 = vmatprep.subr.mxu0 0.0
  %259 = vmatpush1.msra.mxu0 0.0
  %260 = vmatprep.subr.mxu0 0.0
  %261 = vmatpush1.msra.mxu0 0.0
  %262 = vmatprep.subr.mxu0 0.0
  %263 = vmatpush1.msra.mxu0 0.0
  %264 = vmatprep.subr.mxu0 0.0
  %265 = vmatpush1.msra.mxu0 0.0
  %266 = vmatprep.subr.mxu0 0.0
  %267 = vmatpush1.msra.mxu0 0.0
  %268 = vmatprep.subr.mxu0 0.0
  %269 = vmatpush1.msra.mxu0 0.0
  %270 = vmatprep.subr.mxu0 0.0
  %271 = vmatpush1.msra.mxu0 0.0
  %272 = vmatprep.subr.mxu0 0.0
  %273 = vmatpush1.msra.mxu0 0.0
  %274 = vmatprep.subr.mxu0 0.0
  %275 = vmatpush1.msra.mxu0 0.0
  %276 = vmatprep.subr.mxu0 0.0
  %277 = vmatpush1.msra.mxu0 0.0
  %278 = vmatprep.subr.mxu0 0.0
  %279 = vmatpush1.msra.mxu0 0.0
  %280 = vmatprep.subr.mxu0 0.0
  %281 = vmatpush1.msra.mxu0 0.0
  %282 = vmatprep.subr.mxu0 0.0
  %283 = vmatpush1.msra.mxu0 0.0
  %284 = vmatprep.subr.mxu0 0.0
  %285 = vmatpush1.msra.mxu0 0.0
  %286 = vmatprep.subr.mxu0 0.0
  %287 = vmatpush1.msra.mxu0 0.0
  %288 = vmatprep.subr.mxu0 0.0
  %289 = vmatpush1.msra.mxu0 0.0
  %290 = vmatprep.subr.mxu0 0.0
  %291 = vmatpush1.msra.mxu0 0.0
  %292 = vmatprep.subr.mxu0 0.0
  %293 = vmatpush1.msra.mxu0 0.0
  %294 = vmatprep.subr.mxu0 0.0
  %295 = vmatpush1.msra.mxu0 0.0
  %296 = vmatprep.subr.mxu0 0.0
  %297 = vmatpush1.msra.mxu0 0.0
  %298 = vmatprep.subr.mxu0 0.0
  %299 = vmatpush1.msra.mxu0 0.0
  %300 = vmatprep.mubr.f32.mxu0 0.0
  %301 = vmatmul.mubr.f32.gmra.mrb[0].mxu0 %v220
  %v302 = vpop.f32.mrb[0].mxu0
  %v303 = vadd.f32 0.0, %v302
  %v304 = vpop.f32.mrb[0].mxu0
  %305 = vmatprep.mubr.f32.mxu0 0.0
  %306 = vmatmul.mubr.f32.gmra.mrb[0].mxu0 %v222
  %v307 = vpop.f32.mrb[0].mxu0
  %v308 = vadd.f32 0.0, %v307
  %v309 = vpop.f32.mrb[0].mxu0
  %310 = vmatprep.mubr.f32.mxu0 0.0
  %311 = vmatmul.mubr.f32.gmra.mrb[0].mxu0 %v224
  %v312 = vpop.f32.mrb[0].mxu0
  %v313 = vadd.f32 0.0, %v312
  %v314 = vpop.f32.mrb[0].mxu0
  %315 = vmatprep.mubr.f32.mxu0 0.0
  %316 = vmatmul.mubr.f32.gmra.mrb[0].mxu0 %v226
  %v317 = vpop.f32.mrb[0].mxu0
  %v318 = vadd.f32 0.0, %v317
  %v319 = vpop.f32.mrb[0].mxu0
  %320 = vmatprep.mubr.f32.mxu0 0.0
  %321 = vmatmul.mubr.f32.gmra.mrb[0].mxu0 %v228
  %v322 = vpop.f32.mrb[0].mxu0
  %v323 = vadd.f32 0.0, %v322
  %v324 = vpop.f32.mrb[0].mxu0
  %325 = vmatprep.mubr.f32.mxu0 0.0
  %326 = vmatmul.mubr.f32.gmra.mrb[0].mxu0 %v230
  %v327 = vpop.f32.mrb[0].mxu0
  %v328 = vadd.f32 0.0, %v327
  %v329 = vpop.f32.mrb[0].mxu0
  %330 = vmatprep.mubr.f32.mxu0 0.0
  %331 = vmatmul.mubr.f32.gmra.mrb[0].mxu0 %v232
  %v332 = vpop.f32.mrb[0].mxu0
  %v333 = vadd.f32 0.0, %v332
  %v334 = vpop.f32.mrb[0].mxu0
  %335 = vmatprep.mubr.f32.mxu0 0.0
  %336 = vmatmul.mubr.f32.gmra.mrb[0].mxu0 %v234
  %v337 = vpop.f32.mrb[0].mxu0
  %v338 = vadd.f32 0.0, %v337
  %v339 = vpop.f32.mrb[0].mxu0
  %340 = vdwg.mxu0
  %v341 = vsel %vm219, %v20, 0
  %v343 = vsel %vm219, %v21, 0
  %v345 = vsel %vm219, %v22, 0
  %v347 = vsel %vm219, %v23, 0
  %v349 = vsel %vm219, %v24, 0
  %v351 = vsel %vm219, %v25, 0
  %v353 = vsel %vm219, %v26, 0
  %v355 = vsel %vm219, %v27, 0
  %357 = vmatprep.subr.mxu0 0.0
  %358 = vmatpush1.msra.mxu0 %v192
  %359 = vmatprep.subr.mxu0 0.0
  %360 = vmatpush1.msra.mxu0 0.0
  %361 = vmatprep.subr.mxu0 0.0
  %362 = vmatpush1.msra.mxu0 0.0
  %363 = vmatprep.subr.mxu0 0.0
  %364 = vmatpush1.msra.mxu0 0.0
  %365 = vmatprep.subr.mxu0 0.0
  %366 = vmatpush1.msra.mxu0 0.0
  %367 = vmatprep.subr.mxu0 0.0
  %368 = vmatpush1.msra.mxu0 0.0
  %369 = vmatprep.subr.mxu0 0.0
  %370 = vmatpush1.msra.mxu0 0.0
  %371 = vmatprep.subr.mxu0 0.0
  %372 = vmatpush1.msra.mxu0 0.0
  %373 = vmatprep.subr.mxu0 0.0
  %374 = vmatpush1.msra.mxu0 0.0
  %375 = vmatprep.subr.mxu0 0.0
  %376 = vmatpush1.msra.mxu0 0.0
  %377 = vmatprep.subr.mxu0 0.0
  %378 = vmatpush1.msra.mxu0 0.0
  %379 = vmatprep.subr.mxu0 0.0
  %380 = vmatpush1.msra.mxu0 0.0
  %381 = vmatprep.subr.mxu0 0.0
  %382 = vmatpush1.msra.mxu0 0.0
  %383 = vmatprep.subr.mxu0 0.0
  %384 = vmatpush1.msra.mxu0 0.0
  %385 = vmatprep.subr.mxu0 0.0
  %386 = vmatpush1.msra.mxu0 0.0
  %387 = vmatprep.subr.mxu0 0.0
  %388 = vmatpush1.msra.mxu0 0.0
  %389 = vmatprep.subr.mxu0 0.0
  %390 = vmatpush1.msra.mxu0 0.0
  %391 = vmatprep.subr.mxu0 0.0
  %392 = vmatpush1.msra.mxu0 0.0
  %393 = vmatprep.subr.mxu0 0.0
  %394 = vmatpush1.msra.mxu0 0.0
  %395 = vmatprep.subr.mxu0 0.0
  %396 = vmatpush1.msra.mxu0 0.0
  %397 = vmatprep.subr.mxu0 0.0
  %398 = vmatpush1.msra.mxu0 0.0
  %399 = vmatprep.subr.mxu0 0.0
  %400 = vmatpush1.msra.mxu0 0.0
  %401 = vmatprep.subr.mxu0 0.0
  %402 = vmatpush1.msra.mxu0 0.0
  %403 = vmatprep.subr.mxu0 0.0
  %404 = vmatpush1.msra.mxu0 0.0
  %405 = vmatprep.subr.mxu0 0.0
  %406 = vmatpush1.msra.mxu0 0.0
  %407 = vmatprep.subr.mxu0 0.0
  %408 = vmatpush1.msra.mxu0 0.0
  %409 = vmatprep.subr.mxu0 0.0
  %410 = vmatpush1.msra.mxu0 0.0
  %411 = vmatprep.subr.mxu0 0.0
  %412 = vmatpush1.msra.mxu0 0.0
  %413 = vmatprep.subr.mxu0 0.0
  %414 = vmatpush1.msra.mxu0 0.0
  %415 = vmatprep.subr.mxu0 0.0
  %416 = vmatpush1.msra.mxu0 0.0
  %417 = vmatprep.subr.mxu0 0.0
  %418 = vmatpush1.msra.mxu0 0.0
  %419 = vmatprep.subr.mxu0 0.0
  %420 = vmatpush1.msra.mxu0 0.0
  %421 = vmatprep.mubr.f32.mxu0 0.0
  %422 = vmatmul.mubr.f32.gmra.mrb[0].mxu0 %v341
  %v423 = vpop.f32.mrb[0].mxu0
  %v424 = vadd.f32 %v303, %v423
  %v425 = vpop.f32.mrb[0].mxu0
  %426 = vmatprep.mubr.f32.mxu0 0.0
  %427 = vmatmul.mubr.f32.gmra.mrb[0].mxu0 %v343
  %v428 = vpop.f32.mrb[0].mxu0
  %v429 = vadd.f32 %v308, %v428
  %v430 = vpop.f32.mrb[0].mxu0
  %431 = vmatprep.mubr.f32.mxu0 0.0
  %432 = vmatmul.mubr.f32.gmra.mrb[0].mxu0 %v345
  %v433 = vpop.f32.mrb[0].mxu0
  %v434 = vadd.f32 %v313, %v433
  %v435 = vpop.f32.mrb[0].mxu0
  %436 = vmatprep.mubr.f32.mxu0 0.0
  %437 = vmatmul.mubr.f32.gmra.mrb[0].mxu0 %v347
  %v438 = vpop.f32.mrb[0].mxu0
  %v439 = vadd.f32 %v318, %v438
  %v440 = vpop.f32.mrb[0].mxu0
  %441 = vmatprep.mubr.f32.mxu0 0.0
  %442 = vmatmul.mubr.f32.gmra.mrb[0].mxu0 %v349
  %v443 = vpop.f32.mrb[0].mxu0
  %v444 = vadd.f32 %v323, %v443
  %v445 = vpop.f32.mrb[0].mxu0
  %446 = vmatprep.mubr.f32.mxu0 0.0
  %447 = vmatmul.mubr.f32.gmra.mrb[0].mxu0 %v351
  %v448 = vpop.f32.mrb[0].mxu0
  %v449 = vadd.f32 %v328, %v448
  %v450 = vpop.f32.mrb[0].mxu0
  %451 = vmatprep.mubr.f32.mxu0 0.0
  %452 = vmatmul.mubr.f32.gmra.mrb[0].mxu0 %v353
  %v453 = vpop.f32.mrb[0].mxu0
  %v454 = vadd.f32 %v333, %v453
  %v455 = vpop.f32.mrb[0].mxu0
  %456 = vmatprep.mubr.f32.mxu0 0.0
  %457 = vmatmul.mubr.f32.gmra.mrb[0].mxu0 %v355
  %v458 = vpop.f32.mrb[0].mxu0
  %v459 = vadd.f32 %v338, %v458
  %v460 = vpop.f32.mrb[0].mxu0
  %461 = vdwg.mxu0
  %vm462 = vcmp.gt.f32.partialorder %v424, 0.0
  %vm463 = vcmp.gt.f32.partialorder %v429, 0.0
  %vm464 = vcmp.gt.f32.partialorder %v434, 0.0
  %vm465 = vcmp.gt.f32.partialorder %v439, 0.0
  %vm466 = vcmp.gt.f32.partialorder %v444, 0.0
  %vm467 = vcmp.gt.f32.partialorder %v449, 0.0
  %vm468 = vcmp.gt.f32.partialorder %v454, 0.0
  %vm469 = vcmp.gt.f32.partialorder %v459, 0.0
  %v470 = vmul.f32 %v424, 0.2
  %v471 = vmul.f32 %v429, 0.2
  %v472 = vmul.f32 %v434, 0.2
  %v473 = vmul.f32 %v439, 0.2
  %v474 = vmul.f32 %v444, 0.2
  %v475 = vmul.f32 %v449, 0.2
  %v476 = vmul.f32 %v454, 0.2
  %v477 = vmul.f32 %v459, 0.2
  %v478 = vsel %vm462, %v424, %v470
  %v479 = vsel %vm463, %v429, %v471
  %v480 = vsel %vm464, %v434, %v472
  %v481 = vsel %vm465, %v439, %v473
  %v482 = vsel %vm466, %v444, %v474
  %v483 = vsel %vm467, %v449, %v475
  %v484 = vsel %vm468, %v454, %v476
  %v485 = vsel %vm469, %v459, %v477
  %vm486 = vcmask 72704
  %v488 = vsel %vm486, %v478, 0
  %v491 = vsel %vm486, %v479, 0
  %v494 = vsel %vm486, %v480, 0
  %v497 = vsel %vm486, %v481, 0
  %v500 = vsel %vm486, %v482, 0
  %v503 = vsel %vm486, %v483, 0
  %v506 = vsel %vm486, %v484, 0
  %v509 = vsel %vm486, %v485, 0
  %v512 = vsel %vm486, %v34, 0
  %514 = vmatprep.subr.mxu0 0.0
  %515 = vmatpush1.xpose.msra.mxu0 %v512
  %516 = vmatprep.subr.mxu0 0.0
  %517 = vmatpush1.xpose.msra.mxu0 0.0
  %518 = vmatprep.subr.mxu0 0.0
  %519 = vmatpush1.xpose.msra.mxu0 0.0
  %520 = vmatprep.subr.mxu0 0.0
  %521 = vmatpush1.xpose.msra.mxu0 0.0
  %522 = vmatprep.subr.mxu0 0.0
  %523 = vmatpush1.xpose.msra.mxu0 0.0
  %524 = vmatprep.subr.mxu0 0.0
  %525 = vmatpush1.xpose.msra.mxu0 0.0
  %526 = vmatprep.subr.mxu0 0.0
  %527 = vmatpush1.xpose.msra.mxu0 0.0
  %528 = vmatprep.subr.mxu0 0.0
  %529 = vmatpush1.xpose.msra.mxu0 0.0
  %530 = vmatprep.subr.mxu0 0.0
  %531 = vmatpush1.xpose.msra.mxu0 0.0
  %532 = vmatprep.subr.mxu0 0.0
  %533 = vmatpush1.xpose.msra.mxu0 0.0
  %534 = vmatprep.subr.mxu0 0.0
  %535 = vmatpush1.xpose.msra.mxu0 0.0
  %536 = vmatprep.subr.mxu0 0.0
  %537 = vmatpush1.xpose.msra.mxu0 0.0
  %538 = vmatprep.subr.mxu0 0.0
  %539 = vmatpush1.xpose.msra.mxu0 0.0
  %540 = vmatprep.subr.mxu0 0.0
  %541 = vmatpush1.xpose.msra.mxu0 0.0
  %542 = vmatprep.subr.mxu0 0.0
  %543 = vmatpush1.xpose.msra.mxu0 0.0
  %544 = vmatprep.subr.mxu0 0.0
  %545 = vmatpush1.xpose.msra.mxu0 0.0
  %546 = vmatprep.subr.mxu0 0.0
  %547 = vmatpush1.xpose.msra.mxu0 0.0
  %548 = vmatprep.subr.mxu0 0.0
  %549 = vmatpush1.xpose.msra.mxu0 0.0
  %550 = vmatprep.subr.mxu0 0.0
  %551 = vmatpush1.xpose.msra.mxu0 0.0
  %552 = vmatprep.subr.mxu0 0.0
  %553 = vmatpush1.xpose.msra.mxu0 0.0
  %554 = vmatprep.subr.mxu0 0.0
  %555 = vmatpush1.xpose.msra.mxu0 0.0
  %556 = vmatprep.subr.mxu0 0.0
  %557 = vmatpush1.xpose.msra.mxu0 0.0
  %558 = vmatprep.subr.mxu0 0.0
  %559 = vmatpush1.xpose.msra.mxu0 0.0
  %560 = vmatprep.subr.mxu0 0.0
  %561 = vmatpush1.xpose.msra.mxu0 0.0
  %562 = vmatprep.subr.mxu0 0.0
  %563 = vmatpush1.xpose.msra.mxu0 0.0
  %564 = vmatprep.subr.mxu0 0.0
  %565 = vmatpush1.xpose.msra.mxu0 0.0
  %566 = vmatprep.subr.mxu0 0.0
  %567 = vmatpush1.xpose.msra.mxu0 0.0
  %568 = vmatprep.subr.mxu0 0.0
  %569 = vmatpush1.xpose.msra.mxu0 0.0
  %570 = vmatprep.subr.mxu0 0.0
  %571 = vmatpush1.xpose.msra.mxu0 0.0
  %572 = vmatprep.subr.mxu0 0.0
  %573 = vmatpush1.xpose.msra.mxu0 0.0
  %574 = vmatprep.subr.mxu0 0.0
  %575 = vmatpush1.xpose.msra.mxu0 0.0
  %576 = vmatprep.subr.mxu0 0.0
  %577 = vmatpush1.xpose.msra.mxu0 0.0
  %578 = vmatprep.mubr.f32.mxu0 0.0
  %579 = vmatmul.mubr.f32.gmra.mrb[0].mxu0 %v488
  %v580 = vpop.f32.mrb[0].mxu0
  %v581 = vadd.f32 0.0, %v580
  %v582 = vpop.f32.mrb[0].mxu0
  %583 = vmatprep.mubr.f32.mxu0 0.0
  %584 = vmatmul.mubr.f32.gmra.mrb[0].mxu0 %v491
  %v585 = vpop.f32.mrb[0].mxu0
  %v586 = vadd.f32 0.0, %v585
  %v587 = vpop.f32.mrb[0].mxu0
  %588 = vmatprep.mubr.f32.mxu0 0.0
  %589 = vmatmul.mubr.f32.gmra.mrb[0].mxu0 %v494
  %v590 = vpop.f32.mrb[0].mxu0
  %v591 = vadd.f32 0.0, %v590
  %v592 = vpop.f32.mrb[0].mxu0
  %593 = vmatprep.mubr.f32.mxu0 0.0
  %594 = vmatmul.mubr.f32.gmra.mrb[0].mxu0 %v497
  %v595 = vpop.f32.mrb[0].mxu0
  %v596 = vadd.f32 0.0, %v595
  %v597 = vpop.f32.mrb[0].mxu0
  %598 = vmatprep.mubr.f32.mxu0 0.0
  %599 = vmatmul.mubr.f32.gmra.mrb[0].mxu0 %v500
  %v600 = vpop.f32.mrb[0].mxu0
  %v601 = vadd.f32 0.0, %v600
  %v602 = vpop.f32.mrb[0].mxu0
  %603 = vmatprep.mubr.f32.mxu0 0.0
  %604 = vmatmul.mubr.f32.gmra.mrb[0].mxu0 %v503
  %v605 = vpop.f32.mrb[0].mxu0
  %v606 = vadd.f32 0.0, %v605
  %v607 = vpop.f32.mrb[0].mxu0
  %608 = vmatprep.mubr.f32.mxu0 0.0
  %609 = vmatmul.mubr.f32.gmra.mrb[0].mxu0 %v506
  %v610 = vpop.f32.mrb[0].mxu0
  %v611 = vadd.f32 0.0, %v610
  %v612 = vpop.f32.mrb[0].mxu0
  %613 = vmatprep.mubr.f32.mxu0 0.0
  %614 = vmatmul.mubr.f32.gmra.mrb[0].mxu0 %v509
  %v615 = vpop.f32.mrb[0].mxu0
  %v616 = vadd.f32 0.0, %v615
  %v617 = vpop.f32.mrb[0].mxu0
  %618 = vdwg.mxu0
  %vm619 = vcmp.gt.f32.partialorder %v20, 0.0
  %vm620 = vcmp.gt.f32.partialorder %v21, 0.0
  %vm621 = vcmp.gt.f32.partialorder %v22, 0.0
  %vm622 = vcmp.gt.f32.partialorder %v23, 0.0
  %vm623 = vcmp.gt.f32.partialorder %v24, 0.0
  %vm624 = vcmp.gt.f32.partialorder %v25, 0.0
  %vm625 = vcmp.gt.f32.partialorder %v26, 0.0
  %vm626 = vcmp.gt.f32.partialorder %v27, 0.0
  %v627 = vsel %vm619, 1, 0
  %v628 = vsel %vm620, 1, 0
  %v629 = vsel %vm621, 1, 0
  %v630 = vsel %vm622, 1, 0
  %v631 = vsel %vm623, 1, 0
  %v632 = vsel %vm624, 1, 0
  %v633 = vsel %vm625, 1, 0
  %v634 = vsel %vm626, 1, 0
  %635 = vset.pattern.permute.xlu0 16
  %636 = vperm.xlu0 %635, %v627
  %v637 = vpop.permute.xlu0 %636
  %638 = vset.pattern.permute.xlu0 16
  %639 = vperm.xlu0 %638, %v628
  %v640 = vpop.permute.xlu0 %639
  %641 = vset.pattern.permute.xlu0 16
  %642 = vperm.xlu0 %641, %v629
  %v643 = vpop.permute.xlu0 %642
  %644 = vset.pattern.permute.xlu0 16
  %645 = vperm.xlu0 %644, %v630
  %v646 = vpop.permute.xlu0 %645
  %647 = vset.pattern.permute.xlu0 16
  %648 = vperm.xlu0 %647, %v631
  %v649 = vpop.permute.xlu0 %648
  %650 = vset.pattern.permute.xlu0 16
  %651 = vperm.xlu0 %650, %v632
  %v652 = vpop.permute.xlu0 %651
  %653 = vset.pattern.permute.xlu0 16
  %654 = vperm.xlu0 %653, %v633
  %v655 = vpop.permute.xlu0 %654
  %656 = vset.pattern.permute.xlu0 16
  %657 = vperm.xlu0 %656, %v634
  %v658 = vpop.permute.xlu0 %657
  %vm659 = vcmp.eq.s32.totalorder %v637, 1
  %vm660 = vcmp.eq.s32.totalorder %v640, 1
  %vm661 = vcmp.eq.s32.totalorder %v643, 1
  %vm662 = vcmp.eq.s32.totalorder %v646, 1
  %vm663 = vcmp.eq.s32.totalorder %v649, 1
  %vm664 = vcmp.eq.s32.totalorder %v652, 1
  %vm665 = vcmp.eq.s32.totalorder %v655, 1
  %vm666 = vcmp.eq.s32.totalorder %v658, 1
  %v667 = vsel %vm659, %v581, -1e+30
  %v668 = vsel %vm660, %v586, -1e+30
  %v669 = vsel %vm661, %v591, -1e+30
  %v670 = vsel %vm662, %v596, -1e+30
  %v671 = vsel %vm663, %v601, -1e+30
  %v672 = vsel %vm664, %v606, -1e+30
  %v673 = vsel %vm665, %v611, -1e+30
  %v674 = vsel %vm666, %v616, -1e+30
  %vm675 = vcmask 23552
  %v676 = vsel %vm675, %v667, -inf
  %v677 = vsel %vm675, %v668, -inf
  %v678 = vsel %vm675, %v669, -inf
  %v679 = vsel %vm675, %v670, -inf
  %v680 = vsel %vm675, %v671, -inf
  %v681 = vmax.f32 %v676, %v680
  %v682 = vsel %vm675, %v672, -inf
  %v683 = vmax.f32 %v677, %v682
  %v684 = vsel %vm675, %v673, -inf
  %v685 = vmax.f32 %v678, %v684
  %v686 = vsel %vm675, %v674, -inf
  %v687 = vmax.f32 %v679, %v686
  %v688 = vmax.f32 %v681, %v683
  %v689 = vmax.f32 %v685, %v687
  %v690 = vmax.f32 %v688, %v689
  %v691 = vrot.slane %v690, 4
  %v692 = vmax.f32 %v690, %v691
  %v693 = vrot.slane %v692, 2
  %v694 = vmax.f32 %v692, %v693
  %v695 = vrot.slane %v694, 1
  %v696 = vmax.f32 %v694, %v695
  %v697 = vsub.f32 %v667, %v696
  %v698 = vsub.f32 %v668, %v696
  %v699 = vsub.f32 %v669, %v696
  %v700 = vsub.f32 %v670, %v696
  %v701 = vsub.f32 %v671, %v696
  %v702 = vsub.f32 %v672, %v696
  %v703 = vsub.f32 %v673, %v696
  %v704 = vsub.f32 %v674, %v696
  %v705 = vmul.f32 %v697, 1.442695
  %v706 = vpow.pop %v705
  %v707 = vmul.f32 %v698, 1.442695
  %v708 = vpow.pop %v707
  %v709 = vmul.f32 %v699, 1.442695
  %v710 = vpow.pop %v709
  %v711 = vmul.f32 %v700, 1.442695
  %v712 = vpow.pop %v711
  %v713 = vmul.f32 %v701, 1.442695
  %v714 = vpow.pop %v713
  %v715 = vmul.f32 %v702, 1.442695
  %v716 = vpow.pop %v715
  %v717 = vmul.f32 %v703, 1.442695
  %v718 = vpow.pop %v717
  %v719 = vmul.f32 %v704, 1.442695
  %v720 = vpow.pop %v719
  %vm721 = vcmask 523264
  %v723 = vsel %vm721, %v28, 0
  %725 = vmatprep.subr.mxu0 0.0
  %726 = vmatpush1.msra.mxu0 %v706
  %727 = vmatprep.subr.mxu0 0.0
  %728 = vmatpush1.msra.mxu0 %v708
  %729 = vmatprep.subr.mxu0 0.0
  %730 = vmatpush1.msra.mxu0 %v710
  %731 = vmatprep.subr.mxu0 0.0
  %732 = vmatpush1.msra.mxu0 %v712
  %733 = vmatprep.subr.mxu0 0.0
  %734 = vmatpush1.msra.mxu0 %v714
  %735 = vmatprep.subr.mxu0 0.0
  %736 = vmatpush1.msra.mxu0 %v716
  %737 = vmatprep.subr.mxu0 0.0
  %738 = vmatpush1.msra.mxu0 %v718
  %739 = vmatprep.subr.mxu0 0.0
  %740 = vmatpush1.msra.mxu0 %v720
  %741 = vmatprep.subr.mxu0 0.0
  %742 = vmatpush1.msra.mxu0 0.0
  %743 = vmatprep.subr.mxu0 0.0
  %744 = vmatpush1.msra.mxu0 0.0
  %745 = vmatprep.subr.mxu0 0.0
  %746 = vmatpush1.msra.mxu0 0.0
  %747 = vmatprep.subr.mxu0 0.0
  %748 = vmatpush1.msra.mxu0 0.0
  %749 = vmatprep.subr.mxu0 0.0
  %750 = vmatpush1.msra.mxu0 0.0
  %751 = vmatprep.subr.mxu0 0.0
  %752 = vmatpush1.msra.mxu0 0.0
  %753 = vmatprep.subr.mxu0 0.0
  %754 = vmatpush1.msra.mxu0 0.0
  %755 = vmatprep.subr.mxu0 0.0
  %756 = vmatpush1.msra.mxu0 0.0
  %757 = vmatprep.subr.mxu0 0.0
  %758 = vmatpush1.msra.mxu0 0.0
  %759 = vmatprep.subr.mxu0 0.0
  %760 = vmatpush1.msra.mxu0 0.0
  %761 = vmatprep.subr.mxu0 0.0
  %762 = vmatpush1.msra.mxu0 0.0
  %763 = vmatprep.subr.mxu0 0.0
  %764 = vmatpush1.msra.mxu0 0.0
  %765 = vmatprep.subr.mxu0 0.0
  %766 = vmatpush1.msra.mxu0 0.0
  %767 = vmatprep.subr.mxu0 0.0
  %768 = vmatpush1.msra.mxu0 0.0
  %769 = vmatprep.subr.mxu0 0.0
  %770 = vmatpush1.msra.mxu0 0.0
  %771 = vmatprep.subr.mxu0 0.0
  %772 = vmatpush1.msra.mxu0 0.0
  %773 = vmatprep.subr.mxu0 0.0
  %774 = vmatpush1.msra.mxu0 0.0
  %775 = vmatprep.subr.mxu0 0.0
  %776 = vmatpush1.msra.mxu0 0.0
  %777 = vmatprep.subr.mxu0 0.0
  %778 = vmatpush1.msra.mxu0 0.0
  %779 = vmatprep.subr.mxu0 0.0
  %780 = vmatpush1.msra.mxu0 0.0
  %781 = vmatprep.subr.mxu0 0.0
  %782 = vmatpush1.msra.mxu0 0.0
  %783 = vmatprep.subr.mxu0 0.0
  %784 = vmatpush1.msra.mxu0 0.0
  %785 = vmatprep.subr.mxu0 0.0
  %786 = vmatpush1.msra.mxu0 0.0
  %787 = vmatprep.subr.mxu0 0.0
  %788 = vmatpush1.msra.mxu0 0.0
  %789 = vmatprep.mubr.f32.mxu0 0.0
  %790 = vmatmul.mubr.f32.gmra.mrb[0].mxu0 %v723
  %v791 = vpop.f32.mrb[0].mxu0
  %v792 = vadd.f32 0.0, %v791
  %v793 = vpop.f32.mrb[0].mxu0
  %794 = vdwg.mxu0
  %v795 = vmax.f32 %v792, 1e-30
  %796 = vmatprep.subr.mxu0 0.0
  %797 = vmatpush1.msra.mxu0 %v795
  %798 = vmatprep.subr.mxu0 0.0
  %799 = vmatpush1.msra.mxu0 0.0
  %800 = vmatprep.subr.mxu0 0.0
  %801 = vmatpush1.msra.mxu0 0.0
  %802 = vmatprep.subr.mxu0 0.0
  %803 = vmatpush1.msra.mxu0 0.0
  %804 = vmatprep.subr.mxu0 0.0
  %805 = vmatpush1.msra.mxu0 0.0
  %806 = vmatprep.subr.mxu0 0.0
  %807 = vmatpush1.msra.mxu0 0.0
  %808 = vmatprep.subr.mxu0 0.0
  %809 = vmatpush1.msra.mxu0 0.0
  %810 = vmatprep.subr.mxu0 0.0
  %811 = vmatpush1.msra.mxu0 0.0
  %812 = vmatprep.subr.mxu0 0.0
  %813 = vmatpush1.msra.mxu0 0.0
  %814 = vmatprep.subr.mxu0 0.0
  %815 = vmatpush1.msra.mxu0 0.0
  %816 = vmatprep.subr.mxu0 0.0
  %817 = vmatpush1.msra.mxu0 0.0
  %818 = vmatprep.subr.mxu0 0.0
  %819 = vmatpush1.msra.mxu0 0.0
  %820 = vmatprep.subr.mxu0 0.0
  %821 = vmatpush1.msra.mxu0 0.0
  %822 = vmatprep.subr.mxu0 0.0
  %823 = vmatpush1.msra.mxu0 0.0
  %824 = vmatprep.subr.mxu0 0.0
  %825 = vmatpush1.msra.mxu0 0.0
  %826 = vmatprep.subr.mxu0 0.0
  %827 = vmatpush1.msra.mxu0 0.0
  %828 = vmatprep.subr.mxu0 0.0
  %829 = vmatpush1.msra.mxu0 0.0
  %830 = vmatprep.subr.mxu0 0.0
  %831 = vmatpush1.msra.mxu0 0.0
  %832 = vmatprep.subr.mxu0 0.0
  %833 = vmatpush1.msra.mxu0 0.0
  %834 = vmatprep.subr.mxu0 0.0
  %835 = vmatpush1.msra.mxu0 0.0
  %836 = vmatprep.subr.mxu0 0.0
  %837 = vmatpush1.msra.mxu0 0.0
  %838 = vmatprep.subr.mxu0 0.0
  %839 = vmatpush1.msra.mxu0 0.0
  %840 = vmatprep.subr.mxu0 0.0
  %841 = vmatpush1.msra.mxu0 0.0
  %842 = vmatprep.subr.mxu0 0.0
  %843 = vmatpush1.msra.mxu0 0.0
  %844 = vmatprep.subr.mxu0 0.0
  %845 = vmatpush1.msra.mxu0 0.0
  %846 = vmatprep.subr.mxu0 0.0
  %847 = vmatpush1.msra.mxu0 0.0
  %848 = vmatprep.subr.mxu0 0.0
  %849 = vmatpush1.msra.mxu0 0.0
  %850 = vmatprep.subr.mxu0 0.0
  %851 = vmatpush1.msra.mxu0 0.0
  %852 = vmatprep.subr.mxu0 0.0
  %853 = vmatpush1.msra.mxu0 0.0
  %854 = vmatprep.subr.mxu0 0.0
  %855 = vmatpush1.msra.mxu0 0.0
  %856 = vmatprep.subr.mxu0 0.0
  %857 = vmatpush1.msra.mxu0 0.0
  %858 = vmatprep.subr.mxu0 0.0
  %859 = vmatpush1.msra.mxu0 0.0
  %860 = vmatprep.mubr.f32.mxu0 0.0
  %861 = vmatmul.mubr.f32.gmra.mrb[0].mxu0 %v341
  %v862 = vpop.f32.mrb[0].mxu0
  %v863 = vadd.f32 0.0, %v862
  %v864 = vpop.f32.mrb[0].mxu0
  %865 = vmatprep.mubr.f32.mxu0 0.0
  %866 = vmatmul.mubr.f32.gmra.mrb[0].mxu0 %v343
  %v867 = vpop.f32.mrb[0].mxu0
  %v868 = vadd.f32 0.0, %v867
  %v869 = vpop.f32.mrb[0].mxu0
  %870 = vmatprep.mubr.f32.mxu0 0.0
  %871 = vmatmul.mubr.f32.gmra.mrb[0].mxu0 %v345
  %v872 = vpop.f32.mrb[0].mxu0
  %v873 = vadd.f32 0.0, %v872
  %v874 = vpop.f32.mrb[0].mxu0
  %875 = vmatprep.mubr.f32.mxu0 0.0
  %876 = vmatmul.mubr.f32.gmra.mrb[0].mxu0 %v347
  %v877 = vpop.f32.mrb[0].mxu0
  %v878 = vadd.f32 0.0, %v877
  %v879 = vpop.f32.mrb[0].mxu0
  %880 = vmatprep.mubr.f32.mxu0 0.0
  %881 = vmatmul.mubr.f32.gmra.mrb[0].mxu0 %v349
  %v882 = vpop.f32.mrb[0].mxu0
  %v883 = vadd.f32 0.0, %v882
  %v884 = vpop.f32.mrb[0].mxu0
  %885 = vmatprep.mubr.f32.mxu0 0.0
  %886 = vmatmul.mubr.f32.gmra.mrb[0].mxu0 %v351
  %v887 = vpop.f32.mrb[0].mxu0
  %v888 = vadd.f32 0.0, %v887
  %v889 = vpop.f32.mrb[0].mxu0
  %890 = vmatprep.mubr.f32.mxu0 0.0
  %891 = vmatmul.mubr.f32.gmra.mrb[0].mxu0 %v353
  %v892 = vpop.f32.mrb[0].mxu0
  %v893 = vadd.f32 0.0, %v892
  %v894 = vpop.f32.mrb[0].mxu0
  %895 = vmatprep.mubr.f32.mxu0 0.0
  %896 = vmatmul.mubr.f32.gmra.mrb[0].mxu0 %v355
  %v897 = vpop.f32.mrb[0].mxu0
  %v898 = vadd.f32 0.0, %v897
  %v899 = vpop.f32.mrb[0].mxu0
  %900 = vdwg.mxu0
  %v901 = vrcp.pop %v863
  %v902 = vmul.f32 %v706, %v901
  %v903 = vrcp.pop %v868
  %v904 = vmul.f32 %v708, %v903
  %v905 = vrcp.pop %v873
  %v906 = vmul.f32 %v710, %v905
  %v907 = vrcp.pop %v878
  %v908 = vmul.f32 %v712, %v907
  %v909 = vrcp.pop %v883
  %v910 = vmul.f32 %v714, %v909
  %v911 = vrcp.pop %v888
  %v912 = vmul.f32 %v716, %v911
  %v913 = vrcp.pop %v893
  %v914 = vmul.f32 %v718, %v913
  %v915 = vrcp.pop %v898
  %v916 = vmul.f32 %v720, %v915
  %v918 = vsel %vm675, %v902, 0
  %v921 = vsel %vm675, %v904, 0
  %v924 = vsel %vm675, %v906, 0
  %v927 = vsel %vm675, %v908, 0
  %v930 = vsel %vm675, %v910, 0
  %v933 = vsel %vm675, %v912, 0
  %v936 = vsel %vm675, %v914, 0
  %v939 = vsel %vm675, %v916, 0
  %vm941 = vcmask 1042432
  %v943 = vsel %vm941, %v35, 0
  %945 = vmatprep.subr.mxu0 0.0
  %946 = vmatpush1.msra.mxu0 %v943
  %947 = vmatprep.subr.mxu0 0.0
  %948 = vmatpush1.msra.mxu0 0.0
  %949 = vmatprep.subr.mxu0 0.0
  %950 = vmatpush1.msra.mxu0 0.0
  %951 = vmatprep.subr.mxu0 0.0
  %952 = vmatpush1.msra.mxu0 0.0
  %953 = vmatprep.subr.mxu0 0.0
  %954 = vmatpush1.msra.mxu0 0.0
  %955 = vmatprep.subr.mxu0 0.0
  %956 = vmatpush1.msra.mxu0 0.0
  %957 = vmatprep.subr.mxu0 0.0
  %958 = vmatpush1.msra.mxu0 0.0
  %959 = vmatprep.subr.mxu0 0.0
  %960 = vmatpush1.msra.mxu0 0.0
  %961 = vmatprep.subr.mxu0 0.0
  %962 = vmatpush1.msra.mxu0 0.0
  %963 = vmatprep.subr.mxu0 0.0
  %964 = vmatpush1.msra.mxu0 0.0
  %965 = vmatprep.subr.mxu0 0.0
  %966 = vmatpush1.msra.mxu0 0.0
  %967 = vmatprep.subr.mxu0 0.0
  %968 = vmatpush1.msra.mxu0 0.0
  %969 = vmatprep.subr.mxu0 0.0
  %970 = vmatpush1.msra.mxu0 0.0
  %971 = vmatprep.subr.mxu0 0.0
  %972 = vmatpush1.msra.mxu0 0.0
  %973 = vmatprep.subr.mxu0 0.0
  %974 = vmatpush1.msra.mxu0 0.0
  %975 = vmatprep.subr.mxu0 0.0
  %976 = vmatpush1.msra.mxu0 0.0
  %977 = vmatprep.subr.mxu0 0.0
  %978 = vmatpush1.msra.mxu0 0.0
  %979 = vmatprep.subr.mxu0 0.0
  %980 = vmatpush1.msra.mxu0 0.0
  %981 = vmatprep.subr.mxu0 0.0
  %982 = vmatpush1.msra.mxu0 0.0
  %983 = vmatprep.subr.mxu0 0.0
  %984 = vmatpush1.msra.mxu0 0.0
  %985 = vmatprep.subr.mxu0 0.0
  %986 = vmatpush1.msra.mxu0 0.0
  %987 = vmatprep.subr.mxu0 0.0
  %988 = vmatpush1.msra.mxu0 0.0
  %989 = vmatprep.subr.mxu0 0.0
  %990 = vmatpush1.msra.mxu0 0.0
  %991 = vmatprep.subr.mxu0 0.0
  %992 = vmatpush1.msra.mxu0 0.0
  %993 = vmatprep.subr.mxu0 0.0
  %994 = vmatpush1.msra.mxu0 0.0
  %995 = vmatprep.subr.mxu0 0.0
  %996 = vmatpush1.msra.mxu0 0.0
  %997 = vmatprep.subr.mxu0 0.0
  %998 = vmatpush1.msra.mxu0 0.0
  %999 = vmatprep.subr.mxu0 0.0
  %1000 = vmatpush1.msra.mxu0 0.0
  %1001 = vmatprep.subr.mxu0 0.0
  %1002 = vmatpush1.msra.mxu0 0.0
  %1003 = vmatprep.subr.mxu0 0.0
  %1004 = vmatpush1.msra.mxu0 0.0
  %1005 = vmatprep.subr.mxu0 0.0
  %1006 = vmatpush1.msra.mxu0 0.0
  %1007 = vmatprep.subr.mxu0 0.0
  %1008 = vmatpush1.msra.mxu0 0.0
  %1009 = vmatprep.mubr.f32.mxu0 0.0
  %1010 = vmatmul.mubr.f32.gmra.mrb[0].mxu0 %v918
  %v1011 = vpop.f32.mrb[0].mxu0
  %v1012 = vadd.f32 0.0, %v1011
  %v1013 = vpop.f32.mrb[0].mxu0
  %1014 = vmatprep.mubr.f32.mxu0 0.0
  %1015 = vmatmul.mubr.f32.gmra.mrb[0].mxu0 %v921
  %v1016 = vpop.f32.mrb[0].mxu0
  %v1017 = vadd.f32 0.0, %v1016
  %v1018 = vpop.f32.mrb[0].mxu0
  %1019 = vmatprep.mubr.f32.mxu0 0.0
  %1020 = vmatmul.mubr.f32.gmra.mrb[0].mxu0 %v924
  %v1021 = vpop.f32.mrb[0].mxu0
  %v1022 = vadd.f32 0.0, %v1021
  %v1023 = vpop.f32.mrb[0].mxu0
  %1024 = vmatprep.mubr.f32.mxu0 0.0
  %1025 = vmatmul.mubr.f32.gmra.mrb[0].mxu0 %v927
  %v1026 = vpop.f32.mrb[0].mxu0
  %v1027 = vadd.f32 0.0, %v1026
  %v1028 = vpop.f32.mrb[0].mxu0
  %1029 = vmatprep.mubr.f32.mxu0 0.0
  %1030 = vmatmul.mubr.f32.gmra.mrb[0].mxu0 %v930
  %v1031 = vpop.f32.mrb[0].mxu0
  %v1032 = vadd.f32 0.0, %v1031
  %v1033 = vpop.f32.mrb[0].mxu0
  %1034 = vmatprep.mubr.f32.mxu0 0.0
  %1035 = vmatmul.mubr.f32.gmra.mrb[0].mxu0 %v933
  %v1036 = vpop.f32.mrb[0].mxu0
  %v1037 = vadd.f32 0.0, %v1036
  %v1038 = vpop.f32.mrb[0].mxu0
  %1039 = vmatprep.mubr.f32.mxu0 0.0
  %1040 = vmatmul.mubr.f32.gmra.mrb[0].mxu0 %v936
  %v1041 = vpop.f32.mrb[0].mxu0
  %v1042 = vadd.f32 0.0, %v1041
  %v1043 = vpop.f32.mrb[0].mxu0
  %1044 = vmatprep.mubr.f32.mxu0 0.0
  %1045 = vmatmul.mubr.f32.gmra.mrb[0].mxu0 %v939
  %v1046 = vpop.f32.mrb[0].mxu0
  %v1047 = vadd.f32 0.0, %v1046
  %v1048 = vpop.f32.mrb[0].mxu0
  %1049 = vdwg.mxu0
  %v1050 = vmul.f32 %v1012, %v303
  %v1051 = vmul.f32 %v1017, %v308
  %v1052 = vmul.f32 %v1022, %v313
  %v1053 = vmul.f32 %v1027, %v318
  %v1054 = vmul.f32 %v1032, %v323
  %v1055 = vmul.f32 %v1037, %v328
  %v1056 = vmul.f32 %v1042, %v333
  %v1057 = vmul.f32 %v1047, %v338
  %v1058 = vld [vmem:[%s3 + $0x10] sm:$0x1]
  %v1059 = vlaneseq
  %v1060 = vshrl.u32 %v1059, 7
  %v1061 = vsub.s32 0, %v1060
  %v1062 = vrot.slane %v1058, %v1061
  %1063 = vmatprep.subr.mxu0 0.0
  %1064 = vmatpush1.msra.mxu0 %v1050
  %1065 = vmatprep.subr.mxu0 0.0
  %1066 = vmatpush1.msra.mxu0 %v1051
  %1067 = vmatprep.subr.mxu0 0.0
  %1068 = vmatpush1.msra.mxu0 %v1052
  %1069 = vmatprep.subr.mxu0 0.0
  %1070 = vmatpush1.msra.mxu0 %v1053
  %1071 = vmatprep.subr.mxu0 0.0
  %1072 = vmatpush1.msra.mxu0 %v1054
  %1073 = vmatprep.subr.mxu0 0.0
  %1074 = vmatpush1.msra.mxu0 %v1055
  %1075 = vmatprep.subr.mxu0 0.0
  %1076 = vmatpush1.msra.mxu0 %v1056
  %1077 = vmatprep.subr.mxu0 0.0
  %1078 = vmatpush1.msra.mxu0 %v1057
  %1079 = vmatprep.subr.mxu0 0.0
  %1080 = vmatpush1.msra.mxu0 0.0
  %1081 = vmatprep.subr.mxu0 0.0
  %1082 = vmatpush1.msra.mxu0 0.0
  %1083 = vmatprep.subr.mxu0 0.0
  %1084 = vmatpush1.msra.mxu0 0.0
  %1085 = vmatprep.subr.mxu0 0.0
  %1086 = vmatpush1.msra.mxu0 0.0
  %1087 = vmatprep.subr.mxu0 0.0
  %1088 = vmatpush1.msra.mxu0 0.0
  %1089 = vmatprep.subr.mxu0 0.0
  %1090 = vmatpush1.msra.mxu0 0.0
  %1091 = vmatprep.subr.mxu0 0.0
  %1092 = vmatpush1.msra.mxu0 0.0
  %1093 = vmatprep.subr.mxu0 0.0
  %1094 = vmatpush1.msra.mxu0 0.0
  %1095 = vmatprep.subr.mxu0 0.0
  %1096 = vmatpush1.msra.mxu0 0.0
  %1097 = vmatprep.subr.mxu0 0.0
  %1098 = vmatpush1.msra.mxu0 0.0
  %1099 = vmatprep.subr.mxu0 0.0
  %1100 = vmatpush1.msra.mxu0 0.0
  %1101 = vmatprep.subr.mxu0 0.0
  %1102 = vmatpush1.msra.mxu0 0.0
  %1103 = vmatprep.subr.mxu0 0.0
  %1104 = vmatpush1.msra.mxu0 0.0
  %1105 = vmatprep.subr.mxu0 0.0
  %1106 = vmatpush1.msra.mxu0 0.0
  %1107 = vmatprep.subr.mxu0 0.0
  %1108 = vmatpush1.msra.mxu0 0.0
  %1109 = vmatprep.subr.mxu0 0.0
  %1110 = vmatpush1.msra.mxu0 0.0
  %1111 = vmatprep.subr.mxu0 0.0
  %1112 = vmatpush1.msra.mxu0 0.0
  %1113 = vmatprep.subr.mxu0 0.0
  %1114 = vmatpush1.msra.mxu0 0.0
  %1115 = vmatprep.subr.mxu0 0.0
  %1116 = vmatpush1.msra.mxu0 0.0
  %1117 = vmatprep.subr.mxu0 0.0
  %1118 = vmatpush1.msra.mxu0 0.0
  %1119 = vmatprep.subr.mxu0 0.0
  %1120 = vmatpush1.msra.mxu0 0.0
  %1121 = vmatprep.subr.mxu0 0.0
  %1122 = vmatpush1.msra.mxu0 0.0
  %1123 = vmatprep.subr.mxu0 0.0
  %1124 = vmatpush1.msra.mxu0 0.0
  %1125 = vmatprep.subr.mxu0 0.0
  %1126 = vmatpush1.msra.mxu0 0.0
  %1127 = vmatprep.mubr.f32.mxu0 0.0
  %1128 = vmatmul.mubr.f32.gmra.mrb[0].mxu0 %v723
  %v1129 = vpop.f32.mrb[0].mxu0
  %v1130 = vadd.f32 %v1062, %v1129
  %v1131 = vpop.f32.mrb[0].mxu0
  %1132 = vdwg.mxu0
  %vm1133 = vcmp.gt.f32.partialorder %v1130, 0.0
  %v1134 = vmin.f32 %v1130, 0.0
  %v1135 = vmul.f32 %v1134, 1.442695
  %v1136 = vpow.pop %v1135
  %v1137 = vsub.f32 %v1136, 1.0
  %v1138 = vsel %vm1133, %v1130, %v1137
  %v1139 = vld [vmem:[%s4] sm:$0xff]
  %v1140 = vld [vmem:[%s4 + $0x8] sm:$0x1]
  %v1141 = vld [vmem:[%s4 + $0x9] sm:$0xff]
  %v1142 = vld [vmem:[%s4 + $0x11] sm:$0x1]
  %v1143 = vld [vmem:[%s4 + $0x12] sm:$0x1]
  %v1144 = vld [vmem:[%s4 + $0x13] sm:$0x1]
  %v1145 = vld [vmem:[%s4 + $0x14] sm:$0x7]
  %v1146 = vld [vmem:[%s4 + $0x17] sm:$0x7]
  %v1147 = vlaneseq
  %v1148 = vshrl.u32 %v1147, 7
  %v1149 = vsub.s32 0, %v1148
  %v1150 = vrot.slane %v1143, %v1149
  %v1152 = vsel %vm486, %v1138, 0
  %vm1154 = vcmask 1040384
  %v1156 = vsel %vm1154, %v1140, 0
  %1158 = vmatprep.subr.mxu0 0.0
  %1159 = vmatpush1.msra.mxu0 %v1139
  %1160 = vmatprep.subr.mxu0 0.0
  %1161 = vmatpush1.msra.mxu0 %v1156
  %1162 = vmatprep.subr.mxu0 0.0
  %1163 = vmatpush1.msra.mxu0 0.0
  %1164 = vmatprep.subr.mxu0 0.0
  %1165 = vmatpush1.msra.mxu0 0.0
  %1166 = vmatprep.subr.mxu0 0.0
  %1167 = vmatpush1.msra.mxu0 0.0
  %1168 = vmatprep.subr.mxu0 0.0
  %1169 = vmatpush1.msra.mxu0 0.0
  %1170 = vmatprep.subr.mxu0 0.0
  %1171 = vmatpush1.msra.mxu0 0.0
  %1172 = vmatprep.subr.mxu0 0.0
  %1173 = vmatpush1.msra.mxu0 0.0
  %1174 = vmatprep.subr.mxu0 0.0
  %1175 = vmatpush1.msra.mxu0 0.0
  %1176 = vmatprep.subr.mxu0 0.0
  %1177 = vmatpush1.msra.mxu0 0.0
  %1178 = vmatprep.subr.mxu0 0.0
  %1179 = vmatpush1.msra.mxu0 0.0
  %1180 = vmatprep.subr.mxu0 0.0
  %1181 = vmatpush1.msra.mxu0 0.0
  %1182 = vmatprep.subr.mxu0 0.0
  %1183 = vmatpush1.msra.mxu0 0.0
  %1184 = vmatprep.subr.mxu0 0.0
  %1185 = vmatpush1.msra.mxu0 0.0
  %1186 = vmatprep.subr.mxu0 0.0
  %1187 = vmatpush1.msra.mxu0 0.0
  %1188 = vmatprep.subr.mxu0 0.0
  %1189 = vmatpush1.msra.mxu0 0.0
  %1190 = vmatprep.subr.mxu0 0.0
  %1191 = vmatpush1.msra.mxu0 0.0
  %1192 = vmatprep.subr.mxu0 0.0
  %1193 = vmatpush1.msra.mxu0 0.0
  %1194 = vmatprep.subr.mxu0 0.0
  %1195 = vmatpush1.msra.mxu0 0.0
  %1196 = vmatprep.subr.mxu0 0.0
  %1197 = vmatpush1.msra.mxu0 0.0
  %1198 = vmatprep.subr.mxu0 0.0
  %1199 = vmatpush1.msra.mxu0 0.0
  %1200 = vmatprep.subr.mxu0 0.0
  %1201 = vmatpush1.msra.mxu0 0.0
  %1202 = vmatprep.subr.mxu0 0.0
  %1203 = vmatpush1.msra.mxu0 0.0
  %1204 = vmatprep.subr.mxu0 0.0
  %1205 = vmatpush1.msra.mxu0 0.0
  %1206 = vmatprep.subr.mxu0 0.0
  %1207 = vmatpush1.msra.mxu0 0.0
  %1208 = vmatprep.subr.mxu0 0.0
  %1209 = vmatpush1.msra.mxu0 0.0
  %1210 = vmatprep.subr.mxu0 0.0
  %1211 = vmatpush1.msra.mxu0 0.0
  %1212 = vmatprep.subr.mxu0 0.0
  %1213 = vmatpush1.msra.mxu0 0.0
  %1214 = vmatprep.subr.mxu0 0.0
  %1215 = vmatpush1.msra.mxu0 0.0
  %1216 = vmatprep.subr.mxu0 0.0
  %1217 = vmatpush1.msra.mxu0 0.0
  %1218 = vmatprep.subr.mxu0 0.0
  %1219 = vmatpush1.msra.mxu0 0.0
  %1220 = vmatprep.subr.mxu0 0.0
  %1221 = vmatpush1.msra.mxu0 0.0
  %1222 = vmatprep.mubr.f32.mxu0 0.0
  %1223 = vmatmul.mubr.f32.gmra.mrb[0].mxu0 %v1152
  %v1224 = vpop.f32.mrb[0].mxu0
  %v1225 = vadd.f32 %v1150, %v1224
  %v1226 = vpop.f32.mrb[0].mxu0
  %1227 = vdwg.mxu0
  %v1228 = vlaneseq
  %v1229 = vshrl.u32 %v1228, 7
  %v1230 = vsub.s32 0, %v1229
  %v1231 = vrot.slane %v1144, %v1230
  %v1233 = vsel %vm1154, %v1142, 0
  %1235 = vmatprep.subr.mxu0 0.0
  %1236 = vmatpush1.msra.mxu0 %v1141
  %1237 = vmatprep.subr.mxu0 0.0
  %1238 = vmatpush1.msra.mxu0 %v1233
  %1239 = vmatprep.subr.mxu0 0.0
  %1240 = vmatpush1.msra.mxu0 0.0
  %1241 = vmatprep.subr.mxu0 0.0
  %1242 = vmatpush1.msra.mxu0 0.0
  %1243 = vmatprep.subr.mxu0 0.0
  %1244 = vmatpush1.msra.mxu0 0.0
  %1245 = vmatprep.subr.mxu0 0.0
  %1246 = vmatpush1.msra.mxu0 0.0
  %1247 = vmatprep.subr.mxu0 0.0
  %1248 = vmatpush1.msra.mxu0 0.0
  %1249 = vmatprep.subr.mxu0 0.0
  %1250 = vmatpush1.msra.mxu0 0.0
  %1251 = vmatprep.subr.mxu0 0.0
  %1252 = vmatpush1.msra.mxu0 0.0
  %1253 = vmatprep.subr.mxu0 0.0
  %1254 = vmatpush1.msra.mxu0 0.0
  %1255 = vmatprep.subr.mxu0 0.0
  %1256 = vmatpush1.msra.mxu0 0.0
  %1257 = vmatprep.subr.mxu0 0.0
  %1258 = vmatpush1.msra.mxu0 0.0
  %1259 = vmatprep.subr.mxu0 0.0
  %1260 = vmatpush1.msra.mxu0 0.0
  %1261 = vmatprep.subr.mxu0 0.0
  %1262 = vmatpush1.msra.mxu0 0.0
  %1263 = vmatprep.subr.mxu0 0.0
  %1264 = vmatpush1.msra.mxu0 0.0
  %1265 = vmatprep.subr.mxu0 0.0
  %1266 = vmatpush1.msra.mxu0 0.0
  %1267 = vmatprep.subr.mxu0 0.0
  %1268 = vmatpush1.msra.mxu0 0.0
  %1269 = vmatprep.subr.mxu0 0.0
  %1270 = vmatpush1.msra.mxu0 0.0
  %1271 = vmatprep.subr.mxu0 0.0
  %1272 = vmatpush1.msra.mxu0 0.0
  %1273 = vmatprep.subr.mxu0 0.0
  %1274 = vmatpush1.msra.mxu0 0.0
  %1275 = vmatprep.subr.mxu0 0.0
  %1276 = vmatpush1.msra.mxu0 0.0
  %1277 = vmatprep.subr.mxu0 0.0
  %1278 = vmatpush1.msra.mxu0 0.0
  %1279 = vmatprep.subr.mxu0 0.0
  %1280 = vmatpush1.msra.mxu0 0.0
  %1281 = vmatprep.subr.mxu0 0.0
  %1282 = vmatpush1.msra.mxu0 0.0
  %1283 = vmatprep.subr.mxu0 0.0
  %1284 = vmatpush1.msra.mxu0 0.0
  %1285 = vmatprep.subr.mxu0 0.0
  %1286 = vmatpush1.msra.mxu0 0.0
  %1287 = vmatprep.subr.mxu0 0.0
  %1288 = vmatpush1.msra.mxu0 0.0
  %1289 = vmatprep.subr.mxu0 0.0
  %1290 = vmatpush1.msra.mxu0 0.0
  %1291 = vmatprep.subr.mxu0 0.0
  %1292 = vmatpush1.msra.mxu0 0.0
  %1293 = vmatprep.subr.mxu0 0.0
  %1294 = vmatpush1.msra.mxu0 0.0
  %1295 = vmatprep.subr.mxu0 0.0
  %1296 = vmatpush1.msra.mxu0 0.0
  %1297 = vmatprep.subr.mxu0 0.0
  %1298 = vmatpush1.msra.mxu0 0.0
  %1299 = vmatprep.mubr.f32.mxu0 0.0
  %1300 = vmatmul.mubr.f32.gmra.mrb[0].mxu0 %v1152
  %v1301 = vpop.f32.mrb[0].mxu0
  %v1302 = vadd.f32 %v1231, %v1301
  %v1303 = vpop.f32.mrb[0].mxu0
  %1304 = vdwg.mxu0
  %1305 = vmatprep.subr.mxu0 0.0
  %1306 = vmatpush1.msra.mxu0 %v1225
  %1307 = vmatprep.subr.mxu0 0.0
  %1308 = vmatpush1.msra.mxu0 0.0
  %1309 = vmatprep.subr.mxu0 0.0
  %1310 = vmatpush1.msra.mxu0 0.0
  %1311 = vmatprep.subr.mxu0 0.0
  %1312 = vmatpush1.msra.mxu0 0.0
  %1313 = vmatprep.subr.mxu0 0.0
  %1314 = vmatpush1.msra.mxu0 0.0
  %1315 = vmatprep.subr.mxu0 0.0
  %1316 = vmatpush1.msra.mxu0 0.0
  %1317 = vmatprep.subr.mxu0 0.0
  %1318 = vmatpush1.msra.mxu0 0.0
  %1319 = vmatprep.subr.mxu0 0.0
  %1320 = vmatpush1.msra.mxu0 0.0
  %1321 = vmatprep.subr.mxu0 0.0
  %1322 = vmatpush1.msra.mxu0 0.0
  %1323 = vmatprep.subr.mxu0 0.0
  %1324 = vmatpush1.msra.mxu0 0.0
  %1325 = vmatprep.subr.mxu0 0.0
  %1326 = vmatpush1.msra.mxu0 0.0
  %1327 = vmatprep.subr.mxu0 0.0
  %1328 = vmatpush1.msra.mxu0 0.0
  %1329 = vmatprep.subr.mxu0 0.0
  %1330 = vmatpush1.msra.mxu0 0.0
  %1331 = vmatprep.subr.mxu0 0.0
  %1332 = vmatpush1.msra.mxu0 0.0
  %1333 = vmatprep.subr.mxu0 0.0
  %1334 = vmatpush1.msra.mxu0 0.0
  %1335 = vmatprep.subr.mxu0 0.0
  %1336 = vmatpush1.msra.mxu0 0.0
  %1337 = vmatprep.subr.mxu0 0.0
  %1338 = vmatpush1.msra.mxu0 0.0
  %1339 = vmatprep.subr.mxu0 0.0
  %1340 = vmatpush1.msra.mxu0 0.0
  %1341 = vmatprep.subr.mxu0 0.0
  %1342 = vmatpush1.msra.mxu0 0.0
  %1343 = vmatprep.subr.mxu0 0.0
  %1344 = vmatpush1.msra.mxu0 0.0
  %1345 = vmatprep.subr.mxu0 0.0
  %1346 = vmatpush1.msra.mxu0 0.0
  %1347 = vmatprep.subr.mxu0 0.0
  %1348 = vmatpush1.msra.mxu0 0.0
  %1349 = vmatprep.subr.mxu0 0.0
  %1350 = vmatpush1.msra.mxu0 0.0
  %1351 = vmatprep.subr.mxu0 0.0
  %1352 = vmatpush1.msra.mxu0 0.0
  %1353 = vmatprep.subr.mxu0 0.0
  %1354 = vmatpush1.msra.mxu0 0.0
  %1355 = vmatprep.subr.mxu0 0.0
  %1356 = vmatpush1.msra.mxu0 0.0
  %1357 = vmatprep.subr.mxu0 0.0
  %1358 = vmatpush1.msra.mxu0 0.0
  %1359 = vmatprep.subr.mxu0 0.0
  %1360 = vmatpush1.msra.mxu0 0.0
  %1361 = vmatprep.subr.mxu0 0.0
  %1362 = vmatpush1.msra.mxu0 0.0
  %1363 = vmatprep.subr.mxu0 0.0
  %1364 = vmatpush1.msra.mxu0 0.0
  %1365 = vmatprep.subr.mxu0 0.0
  %1366 = vmatpush1.msra.mxu0 0.0
  %1367 = vmatprep.subr.mxu0 0.0
  %1368 = vmatpush1.msra.mxu0 0.0
  %1369 = vmatprep.mubr.f32.mxu0 0.0
  %1370 = vmatmul.mubr.f32.gmra.mrb[0].mxu0 %v220
  %v1371 = vpop.f32.mrb[0].mxu0
  %v1372 = vadd.f32 0.0, %v1371
  %v1373 = vpop.f32.mrb[0].mxu0
  %1374 = vmatprep.mubr.f32.mxu0 0.0
  %1375 = vmatmul.mubr.f32.gmra.mrb[0].mxu0 %v222
  %v1376 = vpop.f32.mrb[0].mxu0
  %v1377 = vadd.f32 0.0, %v1376
  %v1378 = vpop.f32.mrb[0].mxu0
  %1379 = vmatprep.mubr.f32.mxu0 0.0
  %1380 = vmatmul.mubr.f32.gmra.mrb[0].mxu0 %v224
  %v1381 = vpop.f32.mrb[0].mxu0
  %v1382 = vadd.f32 0.0, %v1381
  %v1383 = vpop.f32.mrb[0].mxu0
  %1384 = vmatprep.mubr.f32.mxu0 0.0
  %1385 = vmatmul.mubr.f32.gmra.mrb[0].mxu0 %v226
  %v1386 = vpop.f32.mrb[0].mxu0
  %v1387 = vadd.f32 0.0, %v1386
  %v1388 = vpop.f32.mrb[0].mxu0
  %1389 = vmatprep.mubr.f32.mxu0 0.0
  %1390 = vmatmul.mubr.f32.gmra.mrb[0].mxu0 %v228
  %v1391 = vpop.f32.mrb[0].mxu0
  %v1392 = vadd.f32 0.0, %v1391
  %v1393 = vpop.f32.mrb[0].mxu0
  %1394 = vmatprep.mubr.f32.mxu0 0.0
  %1395 = vmatmul.mubr.f32.gmra.mrb[0].mxu0 %v230
  %v1396 = vpop.f32.mrb[0].mxu0
  %v1397 = vadd.f32 0.0, %v1396
  %v1398 = vpop.f32.mrb[0].mxu0
  %1399 = vmatprep.mubr.f32.mxu0 0.0
  %1400 = vmatmul.mubr.f32.gmra.mrb[0].mxu0 %v232
  %v1401 = vpop.f32.mrb[0].mxu0
  %v1402 = vadd.f32 0.0, %v1401
  %v1403 = vpop.f32.mrb[0].mxu0
  %1404 = vmatprep.mubr.f32.mxu0 0.0
  %1405 = vmatmul.mubr.f32.gmra.mrb[0].mxu0 %v234
  %v1406 = vpop.f32.mrb[0].mxu0
  %v1407 = vadd.f32 0.0, %v1406
  %v1408 = vpop.f32.mrb[0].mxu0
  %1409 = vdwg.mxu0
  %1410 = vmatprep.subr.mxu0 0.0
  %1411 = vmatpush1.msra.mxu0 %v1302
  %1412 = vmatprep.subr.mxu0 0.0
  %1413 = vmatpush1.msra.mxu0 0.0
  %1414 = vmatprep.subr.mxu0 0.0
  %1415 = vmatpush1.msra.mxu0 0.0
  %1416 = vmatprep.subr.mxu0 0.0
  %1417 = vmatpush1.msra.mxu0 0.0
  %1418 = vmatprep.subr.mxu0 0.0
  %1419 = vmatpush1.msra.mxu0 0.0
  %1420 = vmatprep.subr.mxu0 0.0
  %1421 = vmatpush1.msra.mxu0 0.0
  %1422 = vmatprep.subr.mxu0 0.0
  %1423 = vmatpush1.msra.mxu0 0.0
  %1424 = vmatprep.subr.mxu0 0.0
  %1425 = vmatpush1.msra.mxu0 0.0
  %1426 = vmatprep.subr.mxu0 0.0
  %1427 = vmatpush1.msra.mxu0 0.0
  %1428 = vmatprep.subr.mxu0 0.0
  %1429 = vmatpush1.msra.mxu0 0.0
  %1430 = vmatprep.subr.mxu0 0.0
  %1431 = vmatpush1.msra.mxu0 0.0
  %1432 = vmatprep.subr.mxu0 0.0
  %1433 = vmatpush1.msra.mxu0 0.0
  %1434 = vmatprep.subr.mxu0 0.0
  %1435 = vmatpush1.msra.mxu0 0.0
  %1436 = vmatprep.subr.mxu0 0.0
  %1437 = vmatpush1.msra.mxu0 0.0
  %1438 = vmatprep.subr.mxu0 0.0
  %1439 = vmatpush1.msra.mxu0 0.0
  %1440 = vmatprep.subr.mxu0 0.0
  %1441 = vmatpush1.msra.mxu0 0.0
  %1442 = vmatprep.subr.mxu0 0.0
  %1443 = vmatpush1.msra.mxu0 0.0
  %1444 = vmatprep.subr.mxu0 0.0
  %1445 = vmatpush1.msra.mxu0 0.0
  %1446 = vmatprep.subr.mxu0 0.0
  %1447 = vmatpush1.msra.mxu0 0.0
  %1448 = vmatprep.subr.mxu0 0.0
  %1449 = vmatpush1.msra.mxu0 0.0
  %1450 = vmatprep.subr.mxu0 0.0
  %1451 = vmatpush1.msra.mxu0 0.0
  %1452 = vmatprep.subr.mxu0 0.0
  %1453 = vmatpush1.msra.mxu0 0.0
  %1454 = vmatprep.subr.mxu0 0.0
  %1455 = vmatpush1.msra.mxu0 0.0
  %1456 = vmatprep.subr.mxu0 0.0
  %1457 = vmatpush1.msra.mxu0 0.0
  %1458 = vmatprep.subr.mxu0 0.0
  %1459 = vmatpush1.msra.mxu0 0.0
  %1460 = vmatprep.subr.mxu0 0.0
  %1461 = vmatpush1.msra.mxu0 0.0
  %1462 = vmatprep.subr.mxu0 0.0
  %1463 = vmatpush1.msra.mxu0 0.0
  %1464 = vmatprep.subr.mxu0 0.0
  %1465 = vmatpush1.msra.mxu0 0.0
  %1466 = vmatprep.subr.mxu0 0.0
  %1467 = vmatpush1.msra.mxu0 0.0
  %1468 = vmatprep.subr.mxu0 0.0
  %1469 = vmatpush1.msra.mxu0 0.0
  %1470 = vmatprep.subr.mxu0 0.0
  %1471 = vmatpush1.msra.mxu0 0.0
  %1472 = vmatprep.subr.mxu0 0.0
  %1473 = vmatpush1.msra.mxu0 0.0
  %1474 = vmatprep.mubr.f32.mxu0 0.0
  %1475 = vmatmul.mubr.f32.gmra.mrb[0].mxu0 %v341
  %v1476 = vpop.f32.mrb[0].mxu0
  %v1477 = vadd.f32 %v1372, %v1476
  %v1478 = vpop.f32.mrb[0].mxu0
  %1479 = vmatprep.mubr.f32.mxu0 0.0
  %1480 = vmatmul.mubr.f32.gmra.mrb[0].mxu0 %v343
  %v1481 = vpop.f32.mrb[0].mxu0
  %v1482 = vadd.f32 %v1377, %v1481
  %v1483 = vpop.f32.mrb[0].mxu0
  %1484 = vmatprep.mubr.f32.mxu0 0.0
  %1485 = vmatmul.mubr.f32.gmra.mrb[0].mxu0 %v345
  %v1486 = vpop.f32.mrb[0].mxu0
  %v1487 = vadd.f32 %v1382, %v1486
  %v1488 = vpop.f32.mrb[0].mxu0
  %1489 = vmatprep.mubr.f32.mxu0 0.0
  %1490 = vmatmul.mubr.f32.gmra.mrb[0].mxu0 %v347
  %v1491 = vpop.f32.mrb[0].mxu0
  %v1492 = vadd.f32 %v1387, %v1491
  %v1493 = vpop.f32.mrb[0].mxu0
  %1494 = vmatprep.mubr.f32.mxu0 0.0
  %1495 = vmatmul.mubr.f32.gmra.mrb[0].mxu0 %v349
  %v1496 = vpop.f32.mrb[0].mxu0
  %v1497 = vadd.f32 %v1392, %v1496
  %v1498 = vpop.f32.mrb[0].mxu0
  %1499 = vmatprep.mubr.f32.mxu0 0.0
  %1500 = vmatmul.mubr.f32.gmra.mrb[0].mxu0 %v351
  %v1501 = vpop.f32.mrb[0].mxu0
  %v1502 = vadd.f32 %v1397, %v1501
  %v1503 = vpop.f32.mrb[0].mxu0
  %1504 = vmatprep.mubr.f32.mxu0 0.0
  %1505 = vmatmul.mubr.f32.gmra.mrb[0].mxu0 %v353
  %v1506 = vpop.f32.mrb[0].mxu0
  %v1507 = vadd.f32 %v1402, %v1506
  %v1508 = vpop.f32.mrb[0].mxu0
  %1509 = vmatprep.mubr.f32.mxu0 0.0
  %1510 = vmatmul.mubr.f32.gmra.mrb[0].mxu0 %v355
  %v1511 = vpop.f32.mrb[0].mxu0
  %v1512 = vadd.f32 %v1407, %v1511
  %v1513 = vpop.f32.mrb[0].mxu0
  %1514 = vdwg.mxu0
  %vm1515 = vcmp.gt.f32.partialorder %v1477, 0.0
  %vm1516 = vcmp.gt.f32.partialorder %v1482, 0.0
  %vm1517 = vcmp.gt.f32.partialorder %v1487, 0.0
  %vm1518 = vcmp.gt.f32.partialorder %v1492, 0.0
  %vm1519 = vcmp.gt.f32.partialorder %v1497, 0.0
  %vm1520 = vcmp.gt.f32.partialorder %v1502, 0.0
  %vm1521 = vcmp.gt.f32.partialorder %v1507, 0.0
  %vm1522 = vcmp.gt.f32.partialorder %v1512, 0.0
  %v1523 = vmul.f32 %v1477, 0.2
  %v1524 = vmul.f32 %v1482, 0.2
  %v1525 = vmul.f32 %v1487, 0.2
  %v1526 = vmul.f32 %v1492, 0.2
  %v1527 = vmul.f32 %v1497, 0.2
  %v1528 = vmul.f32 %v1502, 0.2
  %v1529 = vmul.f32 %v1507, 0.2
  %v1530 = vmul.f32 %v1512, 0.2
  %v1531 = vsel %vm1515, %v1477, %v1523
  %v1532 = vsel %vm1516, %v1482, %v1524
  %v1533 = vsel %vm1517, %v1487, %v1525
  %v1534 = vsel %vm1518, %v1492, %v1526
  %v1535 = vsel %vm1519, %v1497, %v1527
  %v1536 = vsel %vm1520, %v1502, %v1528
  %v1537 = vsel %vm1521, %v1507, %v1529
  %v1538 = vsel %vm1522, %v1512, %v1530
  %v1540 = vsel %vm486, %v1531, 0
  %v1543 = vsel %vm486, %v1532, 0
  %v1546 = vsel %vm486, %v1533, 0
  %v1549 = vsel %vm486, %v1534, 0
  %v1552 = vsel %vm486, %v1535, 0
  %v1555 = vsel %vm486, %v1536, 0
  %v1558 = vsel %vm486, %v1537, 0
  %v1561 = vsel %vm486, %v1538, 0
  %v1564 = vsel %vm486, %v1145, 0
  %1566 = vmatprep.subr.mxu0 0.0
  %1567 = vmatpush1.xpose.msra.mxu0 %v1564
  %1568 = vmatprep.subr.mxu0 0.0
  %1569 = vmatpush1.xpose.msra.mxu0 0.0
  %1570 = vmatprep.subr.mxu0 0.0
  %1571 = vmatpush1.xpose.msra.mxu0 0.0
  %1572 = vmatprep.subr.mxu0 0.0
  %1573 = vmatpush1.xpose.msra.mxu0 0.0
  %1574 = vmatprep.subr.mxu0 0.0
  %1575 = vmatpush1.xpose.msra.mxu0 0.0
  %1576 = vmatprep.subr.mxu0 0.0
  %1577 = vmatpush1.xpose.msra.mxu0 0.0
  %1578 = vmatprep.subr.mxu0 0.0
  %1579 = vmatpush1.xpose.msra.mxu0 0.0
  %1580 = vmatprep.subr.mxu0 0.0
  %1581 = vmatpush1.xpose.msra.mxu0 0.0
  %1582 = vmatprep.subr.mxu0 0.0
  %1583 = vmatpush1.xpose.msra.mxu0 0.0
  %1584 = vmatprep.subr.mxu0 0.0
  %1585 = vmatpush1.xpose.msra.mxu0 0.0
  %1586 = vmatprep.subr.mxu0 0.0
  %1587 = vmatpush1.xpose.msra.mxu0 0.0
  %1588 = vmatprep.subr.mxu0 0.0
  %1589 = vmatpush1.xpose.msra.mxu0 0.0
  %1590 = vmatprep.subr.mxu0 0.0
  %1591 = vmatpush1.xpose.msra.mxu0 0.0
  %1592 = vmatprep.subr.mxu0 0.0
  %1593 = vmatpush1.xpose.msra.mxu0 0.0
  %1594 = vmatprep.subr.mxu0 0.0
  %1595 = vmatpush1.xpose.msra.mxu0 0.0
  %1596 = vmatprep.subr.mxu0 0.0
  %1597 = vmatpush1.xpose.msra.mxu0 0.0
  %1598 = vmatprep.subr.mxu0 0.0
  %1599 = vmatpush1.xpose.msra.mxu0 0.0
  %1600 = vmatprep.subr.mxu0 0.0
  %1601 = vmatpush1.xpose.msra.mxu0 0.0
  %1602 = vmatprep.subr.mxu0 0.0
  %1603 = vmatpush1.xpose.msra.mxu0 0.0
  %1604 = vmatprep.subr.mxu0 0.0
  %1605 = vmatpush1.xpose.msra.mxu0 0.0
  %1606 = vmatprep.subr.mxu0 0.0
  %1607 = vmatpush1.xpose.msra.mxu0 0.0
  %1608 = vmatprep.subr.mxu0 0.0
  %1609 = vmatpush1.xpose.msra.mxu0 0.0
  %1610 = vmatprep.subr.mxu0 0.0
  %1611 = vmatpush1.xpose.msra.mxu0 0.0
  %1612 = vmatprep.subr.mxu0 0.0
  %1613 = vmatpush1.xpose.msra.mxu0 0.0
  %1614 = vmatprep.subr.mxu0 0.0
  %1615 = vmatpush1.xpose.msra.mxu0 0.0
  %1616 = vmatprep.subr.mxu0 0.0
  %1617 = vmatpush1.xpose.msra.mxu0 0.0
  %1618 = vmatprep.subr.mxu0 0.0
  %1619 = vmatpush1.xpose.msra.mxu0 0.0
  %1620 = vmatprep.subr.mxu0 0.0
  %1621 = vmatpush1.xpose.msra.mxu0 0.0
  %1622 = vmatprep.subr.mxu0 0.0
  %1623 = vmatpush1.xpose.msra.mxu0 0.0
  %1624 = vmatprep.subr.mxu0 0.0
  %1625 = vmatpush1.xpose.msra.mxu0 0.0
  %1626 = vmatprep.subr.mxu0 0.0
  %1627 = vmatpush1.xpose.msra.mxu0 0.0
  %1628 = vmatprep.subr.mxu0 0.0
  %1629 = vmatpush1.xpose.msra.mxu0 0.0
  %1630 = vmatprep.mubr.f32.mxu0 0.0
  %1631 = vmatmul.mubr.f32.gmra.mrb[0].mxu0 %v1540
  %v1632 = vpop.f32.mrb[0].mxu0
  %v1633 = vadd.f32 0.0, %v1632
  %v1634 = vpop.f32.mrb[0].mxu0
  %1635 = vmatprep.mubr.f32.mxu0 0.0
  %1636 = vmatmul.mubr.f32.gmra.mrb[0].mxu0 %v1543
  %v1637 = vpop.f32.mrb[0].mxu0
  %v1638 = vadd.f32 0.0, %v1637
  %v1639 = vpop.f32.mrb[0].mxu0
  %1640 = vmatprep.mubr.f32.mxu0 0.0
  %1641 = vmatmul.mubr.f32.gmra.mrb[0].mxu0 %v1546
  %v1642 = vpop.f32.mrb[0].mxu0
  %v1643 = vadd.f32 0.0, %v1642
  %v1644 = vpop.f32.mrb[0].mxu0
  %1645 = vmatprep.mubr.f32.mxu0 0.0
  %1646 = vmatmul.mubr.f32.gmra.mrb[0].mxu0 %v1549
  %v1647 = vpop.f32.mrb[0].mxu0
  %v1648 = vadd.f32 0.0, %v1647
  %v1649 = vpop.f32.mrb[0].mxu0
  %1650 = vmatprep.mubr.f32.mxu0 0.0
  %1651 = vmatmul.mubr.f32.gmra.mrb[0].mxu0 %v1552
  %v1652 = vpop.f32.mrb[0].mxu0
  %v1653 = vadd.f32 0.0, %v1652
  %v1654 = vpop.f32.mrb[0].mxu0
  %1655 = vmatprep.mubr.f32.mxu0 0.0
  %1656 = vmatmul.mubr.f32.gmra.mrb[0].mxu0 %v1555
  %v1657 = vpop.f32.mrb[0].mxu0
  %v1658 = vadd.f32 0.0, %v1657
  %v1659 = vpop.f32.mrb[0].mxu0
  %1660 = vmatprep.mubr.f32.mxu0 0.0
  %1661 = vmatmul.mubr.f32.gmra.mrb[0].mxu0 %v1558
  %v1662 = vpop.f32.mrb[0].mxu0
  %v1663 = vadd.f32 0.0, %v1662
  %v1664 = vpop.f32.mrb[0].mxu0
  %1665 = vmatprep.mubr.f32.mxu0 0.0
  %1666 = vmatmul.mubr.f32.gmra.mrb[0].mxu0 %v1561
  %v1667 = vpop.f32.mrb[0].mxu0
  %v1668 = vadd.f32 0.0, %v1667
  %v1669 = vpop.f32.mrb[0].mxu0
  %1670 = vdwg.mxu0
  %v1671 = vsel %vm659, %v1633, -1e+30
  %v1672 = vsel %vm660, %v1638, -1e+30
  %v1673 = vsel %vm661, %v1643, -1e+30
  %v1674 = vsel %vm662, %v1648, -1e+30
  %v1675 = vsel %vm663, %v1653, -1e+30
  %v1676 = vsel %vm664, %v1658, -1e+30
  %v1677 = vsel %vm665, %v1663, -1e+30
  %v1678 = vsel %vm666, %v1668, -1e+30
  %v1679 = vsel %vm675, %v1671, -inf
  %v1680 = vsel %vm675, %v1672, -inf
  %v1681 = vsel %vm675, %v1673, -inf
  %v1682 = vsel %vm675, %v1674, -inf
  %v1683 = vsel %vm675, %v1675, -inf
  %v1684 = vmax.f32 %v1679, %v1683
  %v1685 = vsel %vm675, %v1676, -inf
  %v1686 = vmax.f32 %v1680, %v1685
  %v1687 = vsel %vm675, %v1677, -inf
  %v1688 = vmax.f32 %v1681, %v1687
  %v1689 = vsel %vm675, %v1678, -inf
  %v1690 = vmax.f32 %v1682, %v1689
  %v1691 = vmax.f32 %v1684, %v1686
  %v1692 = vmax.f32 %v1688, %v1690
  %v1693 = vmax.f32 %v1691, %v1692
  %v1694 = vrot.slane %v1693, 4
  %v1695 = vmax.f32 %v1693, %v1694
  %v1696 = vrot.slane %v1695, 2
  %v1697 = vmax.f32 %v1695, %v1696
  %v1698 = vrot.slane %v1697, 1
  %v1699 = vmax.f32 %v1697, %v1698
  %v1700 = vsub.f32 %v1671, %v1699
  %v1701 = vsub.f32 %v1672, %v1699
  %v1702 = vsub.f32 %v1673, %v1699
  %v1703 = vsub.f32 %v1674, %v1699
  %v1704 = vsub.f32 %v1675, %v1699
  %v1705 = vsub.f32 %v1676, %v1699
  %v1706 = vsub.f32 %v1677, %v1699
  %v1707 = vsub.f32 %v1678, %v1699
  %v1708 = vmul.f32 %v1700, 1.442695
  %v1709 = vpow.pop %v1708
  %v1710 = vmul.f32 %v1701, 1.442695
  %v1711 = vpow.pop %v1710
  %v1712 = vmul.f32 %v1702, 1.442695
  %v1713 = vpow.pop %v1712
  %v1714 = vmul.f32 %v1703, 1.442695
  %v1715 = vpow.pop %v1714
  %v1716 = vmul.f32 %v1704, 1.442695
  %v1717 = vpow.pop %v1716
  %v1718 = vmul.f32 %v1705, 1.442695
  %v1719 = vpow.pop %v1718
  %v1720 = vmul.f32 %v1706, 1.442695
  %v1721 = vpow.pop %v1720
  %v1722 = vmul.f32 %v1707, 1.442695
  %v1723 = vpow.pop %v1722
  %1724 = vmatprep.subr.mxu0 0.0
  %1725 = vmatpush1.msra.mxu0 %v1709
  %1726 = vmatprep.subr.mxu0 0.0
  %1727 = vmatpush1.msra.mxu0 %v1711
  %1728 = vmatprep.subr.mxu0 0.0
  %1729 = vmatpush1.msra.mxu0 %v1713
  %1730 = vmatprep.subr.mxu0 0.0
  %1731 = vmatpush1.msra.mxu0 %v1715
  %1732 = vmatprep.subr.mxu0 0.0
  %1733 = vmatpush1.msra.mxu0 %v1717
  %1734 = vmatprep.subr.mxu0 0.0
  %1735 = vmatpush1.msra.mxu0 %v1719
  %1736 = vmatprep.subr.mxu0 0.0
  %1737 = vmatpush1.msra.mxu0 %v1721
  %1738 = vmatprep.subr.mxu0 0.0
  %1739 = vmatpush1.msra.mxu0 %v1723
  %1740 = vmatprep.subr.mxu0 0.0
  %1741 = vmatpush1.msra.mxu0 0.0
  %1742 = vmatprep.subr.mxu0 0.0
  %1743 = vmatpush1.msra.mxu0 0.0
  %1744 = vmatprep.subr.mxu0 0.0
  %1745 = vmatpush1.msra.mxu0 0.0
  %1746 = vmatprep.subr.mxu0 0.0
  %1747 = vmatpush1.msra.mxu0 0.0
  %1748 = vmatprep.subr.mxu0 0.0
  %1749 = vmatpush1.msra.mxu0 0.0
  %1750 = vmatprep.subr.mxu0 0.0
  %1751 = vmatpush1.msra.mxu0 0.0
  %1752 = vmatprep.subr.mxu0 0.0
  %1753 = vmatpush1.msra.mxu0 0.0
  %1754 = vmatprep.subr.mxu0 0.0
  %1755 = vmatpush1.msra.mxu0 0.0
  %1756 = vmatprep.subr.mxu0 0.0
  %1757 = vmatpush1.msra.mxu0 0.0
  %1758 = vmatprep.subr.mxu0 0.0
  %1759 = vmatpush1.msra.mxu0 0.0
  %1760 = vmatprep.subr.mxu0 0.0
  %1761 = vmatpush1.msra.mxu0 0.0
  %1762 = vmatprep.subr.mxu0 0.0
  %1763 = vmatpush1.msra.mxu0 0.0
  %1764 = vmatprep.subr.mxu0 0.0
  %1765 = vmatpush1.msra.mxu0 0.0
  %1766 = vmatprep.subr.mxu0 0.0
  %1767 = vmatpush1.msra.mxu0 0.0
  %1768 = vmatprep.subr.mxu0 0.0
  %1769 = vmatpush1.msra.mxu0 0.0
  %1770 = vmatprep.subr.mxu0 0.0
  %1771 = vmatpush1.msra.mxu0 0.0
  %1772 = vmatprep.subr.mxu0 0.0
  %1773 = vmatpush1.msra.mxu0 0.0
  %1774 = vmatprep.subr.mxu0 0.0
  %1775 = vmatpush1.msra.mxu0 0.0
  %1776 = vmatprep.subr.mxu0 0.0
  %1777 = vmatpush1.msra.mxu0 0.0
  %1778 = vmatprep.subr.mxu0 0.0
  %1779 = vmatpush1.msra.mxu0 0.0
  %1780 = vmatprep.subr.mxu0 0.0
  %1781 = vmatpush1.msra.mxu0 0.0
  %1782 = vmatprep.subr.mxu0 0.0
  %1783 = vmatpush1.msra.mxu0 0.0
  %1784 = vmatprep.subr.mxu0 0.0
  %1785 = vmatpush1.msra.mxu0 0.0
  %1786 = vmatprep.subr.mxu0 0.0
  %1787 = vmatpush1.msra.mxu0 0.0
  %1788 = vmatprep.mubr.f32.mxu0 0.0
  %1789 = vmatmul.mubr.f32.gmra.mrb[0].mxu0 %v723
  %v1790 = vpop.f32.mrb[0].mxu0
  %v1791 = vadd.f32 0.0, %v1790
  %v1792 = vpop.f32.mrb[0].mxu0
  %1793 = vdwg.mxu0
  %v1794 = vmax.f32 %v1791, 1e-30
  %1795 = vmatprep.subr.mxu0 0.0
  %1796 = vmatpush1.msra.mxu0 %v1794
  %1797 = vmatprep.subr.mxu0 0.0
  %1798 = vmatpush1.msra.mxu0 0.0
  %1799 = vmatprep.subr.mxu0 0.0
  %1800 = vmatpush1.msra.mxu0 0.0
  %1801 = vmatprep.subr.mxu0 0.0
  %1802 = vmatpush1.msra.mxu0 0.0
  %1803 = vmatprep.subr.mxu0 0.0
  %1804 = vmatpush1.msra.mxu0 0.0
  %1805 = vmatprep.subr.mxu0 0.0
  %1806 = vmatpush1.msra.mxu0 0.0
  %1807 = vmatprep.subr.mxu0 0.0
  %1808 = vmatpush1.msra.mxu0 0.0
  %1809 = vmatprep.subr.mxu0 0.0
  %1810 = vmatpush1.msra.mxu0 0.0
  %1811 = vmatprep.subr.mxu0 0.0
  %1812 = vmatpush1.msra.mxu0 0.0
  %1813 = vmatprep.subr.mxu0 0.0
  %1814 = vmatpush1.msra.mxu0 0.0
  %1815 = vmatprep.subr.mxu0 0.0
  %1816 = vmatpush1.msra.mxu0 0.0
  %1817 = vmatprep.subr.mxu0 0.0
  %1818 = vmatpush1.msra.mxu0 0.0
  %1819 = vmatprep.subr.mxu0 0.0
  %1820 = vmatpush1.msra.mxu0 0.0
  %1821 = vmatprep.subr.mxu0 0.0
  %1822 = vmatpush1.msra.mxu0 0.0
  %1823 = vmatprep.subr.mxu0 0.0
  %1824 = vmatpush1.msra.mxu0 0.0
  %1825 = vmatprep.subr.mxu0 0.0
  %1826 = vmatpush1.msra.mxu0 0.0
  %1827 = vmatprep.subr.mxu0 0.0
  %1828 = vmatpush1.msra.mxu0 0.0
  %1829 = vmatprep.subr.mxu0 0.0
  %1830 = vmatpush1.msra.mxu0 0.0
  %1831 = vmatprep.subr.mxu0 0.0
  %1832 = vmatpush1.msra.mxu0 0.0
  %1833 = vmatprep.subr.mxu0 0.0
  %1834 = vmatpush1.msra.mxu0 0.0
  %1835 = vmatprep.subr.mxu0 0.0
  %1836 = vmatpush1.msra.mxu0 0.0
  %1837 = vmatprep.subr.mxu0 0.0
  %1838 = vmatpush1.msra.mxu0 0.0
  %1839 = vmatprep.subr.mxu0 0.0
  %1840 = vmatpush1.msra.mxu0 0.0
  %1841 = vmatprep.subr.mxu0 0.0
  %1842 = vmatpush1.msra.mxu0 0.0
  %1843 = vmatprep.subr.mxu0 0.0
  %1844 = vmatpush1.msra.mxu0 0.0
  %1845 = vmatprep.subr.mxu0 0.0
  %1846 = vmatpush1.msra.mxu0 0.0
  %1847 = vmatprep.subr.mxu0 0.0
  %1848 = vmatpush1.msra.mxu0 0.0
  %1849 = vmatprep.subr.mxu0 0.0
  %1850 = vmatpush1.msra.mxu0 0.0
  %1851 = vmatprep.subr.mxu0 0.0
  %1852 = vmatpush1.msra.mxu0 0.0
  %1853 = vmatprep.subr.mxu0 0.0
  %1854 = vmatpush1.msra.mxu0 0.0
  %1855 = vmatprep.subr.mxu0 0.0
  %1856 = vmatpush1.msra.mxu0 0.0
  %1857 = vmatprep.subr.mxu0 0.0
  %1858 = vmatpush1.msra.mxu0 0.0
  %1859 = vmatprep.mubr.f32.mxu0 0.0
  %1860 = vmatmul.mubr.f32.gmra.mrb[0].mxu0 %v341
  %v1861 = vpop.f32.mrb[0].mxu0
  %v1862 = vadd.f32 0.0, %v1861
  %v1863 = vpop.f32.mrb[0].mxu0
  %1864 = vmatprep.mubr.f32.mxu0 0.0
  %1865 = vmatmul.mubr.f32.gmra.mrb[0].mxu0 %v343
  %v1866 = vpop.f32.mrb[0].mxu0
  %v1867 = vadd.f32 0.0, %v1866
  %v1868 = vpop.f32.mrb[0].mxu0
  %1869 = vmatprep.mubr.f32.mxu0 0.0
  %1870 = vmatmul.mubr.f32.gmra.mrb[0].mxu0 %v345
  %v1871 = vpop.f32.mrb[0].mxu0
  %v1872 = vadd.f32 0.0, %v1871
  %v1873 = vpop.f32.mrb[0].mxu0
  %1874 = vmatprep.mubr.f32.mxu0 0.0
  %1875 = vmatmul.mubr.f32.gmra.mrb[0].mxu0 %v347
  %v1876 = vpop.f32.mrb[0].mxu0
  %v1877 = vadd.f32 0.0, %v1876
  %v1878 = vpop.f32.mrb[0].mxu0
  %1879 = vmatprep.mubr.f32.mxu0 0.0
  %1880 = vmatmul.mubr.f32.gmra.mrb[0].mxu0 %v349
  %v1881 = vpop.f32.mrb[0].mxu0
  %v1882 = vadd.f32 0.0, %v1881
  %v1883 = vpop.f32.mrb[0].mxu0
  %1884 = vmatprep.mubr.f32.mxu0 0.0
  %1885 = vmatmul.mubr.f32.gmra.mrb[0].mxu0 %v351
  %v1886 = vpop.f32.mrb[0].mxu0
  %v1887 = vadd.f32 0.0, %v1886
  %v1888 = vpop.f32.mrb[0].mxu0
  %1889 = vmatprep.mubr.f32.mxu0 0.0
  %1890 = vmatmul.mubr.f32.gmra.mrb[0].mxu0 %v353
  %v1891 = vpop.f32.mrb[0].mxu0
  %v1892 = vadd.f32 0.0, %v1891
  %v1893 = vpop.f32.mrb[0].mxu0
  %1894 = vmatprep.mubr.f32.mxu0 0.0
  %1895 = vmatmul.mubr.f32.gmra.mrb[0].mxu0 %v355
  %v1896 = vpop.f32.mrb[0].mxu0
  %v1897 = vadd.f32 0.0, %v1896
  %v1898 = vpop.f32.mrb[0].mxu0
  %1899 = vdwg.mxu0
  %v1900 = vrcp.pop %v1862
  %v1901 = vmul.f32 %v1709, %v1900
  %v1902 = vrcp.pop %v1867
  %v1903 = vmul.f32 %v1711, %v1902
  %v1904 = vrcp.pop %v1872
  %v1905 = vmul.f32 %v1713, %v1904
  %v1906 = vrcp.pop %v1877
  %v1907 = vmul.f32 %v1715, %v1906
  %v1908 = vrcp.pop %v1882
  %v1909 = vmul.f32 %v1717, %v1908
  %v1910 = vrcp.pop %v1887
  %v1911 = vmul.f32 %v1719, %v1910
  %v1912 = vrcp.pop %v1892
  %v1913 = vmul.f32 %v1721, %v1912
  %v1914 = vrcp.pop %v1897
  %v1915 = vmul.f32 %v1723, %v1914
  %v1917 = vsel %vm675, %v1901, 0
  %v1920 = vsel %vm675, %v1903, 0
  %v1923 = vsel %vm675, %v1905, 0
  %v1926 = vsel %vm675, %v1907, 0
  %v1929 = vsel %vm675, %v1909, 0
  %v1932 = vsel %vm675, %v1911, 0
  %v1935 = vsel %vm675, %v1913, 0
  %v1938 = vsel %vm675, %v1915, 0
  %v1941 = vsel %vm941, %v1146, 0
  %1943 = vmatprep.subr.mxu0 0.0
  %1944 = vmatpush1.msra.mxu0 %v1941
  %1945 = vmatprep.subr.mxu0 0.0
  %1946 = vmatpush1.msra.mxu0 0.0
  %1947 = vmatprep.subr.mxu0 0.0
  %1948 = vmatpush1.msra.mxu0 0.0
  %1949 = vmatprep.subr.mxu0 0.0
  %1950 = vmatpush1.msra.mxu0 0.0
  %1951 = vmatprep.subr.mxu0 0.0
  %1952 = vmatpush1.msra.mxu0 0.0
  %1953 = vmatprep.subr.mxu0 0.0
  %1954 = vmatpush1.msra.mxu0 0.0
  %1955 = vmatprep.subr.mxu0 0.0
  %1956 = vmatpush1.msra.mxu0 0.0
  %1957 = vmatprep.subr.mxu0 0.0
  %1958 = vmatpush1.msra.mxu0 0.0
  %1959 = vmatprep.subr.mxu0 0.0
  %1960 = vmatpush1.msra.mxu0 0.0
  %1961 = vmatprep.subr.mxu0 0.0
  %1962 = vmatpush1.msra.mxu0 0.0
  %1963 = vmatprep.subr.mxu0 0.0
  %1964 = vmatpush1.msra.mxu0 0.0
  %1965 = vmatprep.subr.mxu0 0.0
  %1966 = vmatpush1.msra.mxu0 0.0
  %1967 = vmatprep.subr.mxu0 0.0
  %1968 = vmatpush1.msra.mxu0 0.0
  %1969 = vmatprep.subr.mxu0 0.0
  %1970 = vmatpush1.msra.mxu0 0.0
  %1971 = vmatprep.subr.mxu0 0.0
  %1972 = vmatpush1.msra.mxu0 0.0
  %1973 = vmatprep.subr.mxu0 0.0
  %1974 = vmatpush1.msra.mxu0 0.0
  %1975 = vmatprep.subr.mxu0 0.0
  %1976 = vmatpush1.msra.mxu0 0.0
  %1977 = vmatprep.subr.mxu0 0.0
  %1978 = vmatpush1.msra.mxu0 0.0
  %1979 = vmatprep.subr.mxu0 0.0
  %1980 = vmatpush1.msra.mxu0 0.0
  %1981 = vmatprep.subr.mxu0 0.0
  %1982 = vmatpush1.msra.mxu0 0.0
  %1983 = vmatprep.subr.mxu0 0.0
  %1984 = vmatpush1.msra.mxu0 0.0
  %1985 = vmatprep.subr.mxu0 0.0
  %1986 = vmatpush1.msra.mxu0 0.0
  %1987 = vmatprep.subr.mxu0 0.0
  %1988 = vmatpush1.msra.mxu0 0.0
  %1989 = vmatprep.subr.mxu0 0.0
  %1990 = vmatpush1.msra.mxu0 0.0
  %1991 = vmatprep.subr.mxu0 0.0
  %1992 = vmatpush1.msra.mxu0 0.0
  %1993 = vmatprep.subr.mxu0 0.0
  %1994 = vmatpush1.msra.mxu0 0.0
  %1995 = vmatprep.subr.mxu0 0.0
  %1996 = vmatpush1.msra.mxu0 0.0
  %1997 = vmatprep.subr.mxu0 0.0
  %1998 = vmatpush1.msra.mxu0 0.0
  %1999 = vmatprep.subr.mxu0 0.0
  %2000 = vmatpush1.msra.mxu0 0.0
  %2001 = vmatprep.subr.mxu0 0.0
  %2002 = vmatpush1.msra.mxu0 0.0
  %2003 = vmatprep.subr.mxu0 0.0
  %2004 = vmatpush1.msra.mxu0 0.0
  %2005 = vmatprep.subr.mxu0 0.0
  %2006 = vmatpush1.msra.mxu0 0.0
  %2007 = vmatprep.mubr.f32.mxu0 0.0
  %2008 = vmatmul.mubr.f32.gmra.mrb[0].mxu0 %v1917
  %v2009 = vpop.f32.mrb[0].mxu0
  %v2010 = vadd.f32 0.0, %v2009
  %v2011 = vpop.f32.mrb[0].mxu0
  %2012 = vmatprep.mubr.f32.mxu0 0.0
  %2013 = vmatmul.mubr.f32.gmra.mrb[0].mxu0 %v1920
  %v2014 = vpop.f32.mrb[0].mxu0
  %v2015 = vadd.f32 0.0, %v2014
  %v2016 = vpop.f32.mrb[0].mxu0
  %2017 = vmatprep.mubr.f32.mxu0 0.0
  %2018 = vmatmul.mubr.f32.gmra.mrb[0].mxu0 %v1923
  %v2019 = vpop.f32.mrb[0].mxu0
  %v2020 = vadd.f32 0.0, %v2019
  %v2021 = vpop.f32.mrb[0].mxu0
  %2022 = vmatprep.mubr.f32.mxu0 0.0
  %2023 = vmatmul.mubr.f32.gmra.mrb[0].mxu0 %v1926
  %v2024 = vpop.f32.mrb[0].mxu0
  %v2025 = vadd.f32 0.0, %v2024
  %v2026 = vpop.f32.mrb[0].mxu0
  %2027 = vmatprep.mubr.f32.mxu0 0.0
  %2028 = vmatmul.mubr.f32.gmra.mrb[0].mxu0 %v1929
  %v2029 = vpop.f32.mrb[0].mxu0
  %v2030 = vadd.f32 0.0, %v2029
  %v2031 = vpop.f32.mrb[0].mxu0
  %2032 = vmatprep.mubr.f32.mxu0 0.0
  %2033 = vmatmul.mubr.f32.gmra.mrb[0].mxu0 %v1932
  %v2034 = vpop.f32.mrb[0].mxu0
  %v2035 = vadd.f32 0.0, %v2034
  %v2036 = vpop.f32.mrb[0].mxu0
  %2037 = vmatprep.mubr.f32.mxu0 0.0
  %2038 = vmatmul.mubr.f32.gmra.mrb[0].mxu0 %v1935
  %v2039 = vpop.f32.mrb[0].mxu0
  %v2040 = vadd.f32 0.0, %v2039
  %v2041 = vpop.f32.mrb[0].mxu0
  %2042 = vmatprep.mubr.f32.mxu0 0.0
  %2043 = vmatmul.mubr.f32.gmra.mrb[0].mxu0 %v1938
  %v2044 = vpop.f32.mrb[0].mxu0
  %v2045 = vadd.f32 0.0, %v2044
  %v2046 = vpop.f32.mrb[0].mxu0
  %2047 = vdwg.mxu0
  %v2048 = vmul.f32 %v2010, %v1372
  %v2049 = vmul.f32 %v2015, %v1377
  %v2050 = vmul.f32 %v2020, %v1382
  %v2051 = vmul.f32 %v2025, %v1387
  %v2052 = vmul.f32 %v2030, %v1392
  %v2053 = vmul.f32 %v2035, %v1397
  %v2054 = vmul.f32 %v2040, %v1402
  %v2055 = vmul.f32 %v2045, %v1407
  %2056 = vmatprep.subr.mxu0 0.0
  %2057 = vmatpush1.msra.mxu0 %v2048
  %2058 = vmatprep.subr.mxu0 0.0
  %2059 = vmatpush1.msra.mxu0 %v2049
  %2060 = vmatprep.subr.mxu0 0.0
  %2061 = vmatpush1.msra.mxu0 %v2050
  %2062 = vmatprep.subr.mxu0 0.0
  %2063 = vmatpush1.msra.mxu0 %v2051
  %2064 = vmatprep.subr.mxu0 0.0
  %2065 = vmatpush1.msra.mxu0 %v2052
  %2066 = vmatprep.subr.mxu0 0.0
  %2067 = vmatpush1.msra.mxu0 %v2053
  %2068 = vmatprep.subr.mxu0 0.0
  %2069 = vmatpush1.msra.mxu0 %v2054
  %2070 = vmatprep.subr.mxu0 0.0
  %2071 = vmatpush1.msra.mxu0 %v2055
  %2072 = vmatprep.subr.mxu0 0.0
  %2073 = vmatpush1.msra.mxu0 0.0
  %2074 = vmatprep.subr.mxu0 0.0
  %2075 = vmatpush1.msra.mxu0 0.0
  %2076 = vmatprep.subr.mxu0 0.0
  %2077 = vmatpush1.msra.mxu0 0.0
  %2078 = vmatprep.subr.mxu0 0.0
  %2079 = vmatpush1.msra.mxu0 0.0
  %2080 = vmatprep.subr.mxu0 0.0
  %2081 = vmatpush1.msra.mxu0 0.0
  %2082 = vmatprep.subr.mxu0 0.0
  %2083 = vmatpush1.msra.mxu0 0.0
  %2084 = vmatprep.subr.mxu0 0.0
  %2085 = vmatpush1.msra.mxu0 0.0
  %2086 = vmatprep.subr.mxu0 0.0
  %2087 = vmatpush1.msra.mxu0 0.0
  %2088 = vmatprep.subr.mxu0 0.0
  %2089 = vmatpush1.msra.mxu0 0.0
  %2090 = vmatprep.subr.mxu0 0.0
  %2091 = vmatpush1.msra.mxu0 0.0
  %2092 = vmatprep.subr.mxu0 0.0
  %2093 = vmatpush1.msra.mxu0 0.0
  %2094 = vmatprep.subr.mxu0 0.0
  %2095 = vmatpush1.msra.mxu0 0.0
  %2096 = vmatprep.subr.mxu0 0.0
  %2097 = vmatpush1.msra.mxu0 0.0
  %2098 = vmatprep.subr.mxu0 0.0
  %2099 = vmatpush1.msra.mxu0 0.0
  %2100 = vmatprep.subr.mxu0 0.0
  %2101 = vmatpush1.msra.mxu0 0.0
  %2102 = vmatprep.subr.mxu0 0.0
  %2103 = vmatpush1.msra.mxu0 0.0
  %2104 = vmatprep.subr.mxu0 0.0
  %2105 = vmatpush1.msra.mxu0 0.0
  %2106 = vmatprep.subr.mxu0 0.0
  %2107 = vmatpush1.msra.mxu0 0.0
  %2108 = vmatprep.subr.mxu0 0.0
  %2109 = vmatpush1.msra.mxu0 0.0
  %2110 = vmatprep.subr.mxu0 0.0
  %2111 = vmatpush1.msra.mxu0 0.0
  %2112 = vmatprep.subr.mxu0 0.0
  %2113 = vmatpush1.msra.mxu0 0.0
  %2114 = vmatprep.subr.mxu0 0.0
  %2115 = vmatpush1.msra.mxu0 0.0
  %2116 = vmatprep.subr.mxu0 0.0
  %2117 = vmatpush1.msra.mxu0 0.0
  %2118 = vmatprep.subr.mxu0 0.0
  %2119 = vmatpush1.msra.mxu0 0.0
  %2120 = vmatprep.mubr.f32.mxu0 0.0
  %2121 = vmatmul.mubr.f32.gmra.mrb[0].mxu0 %v723
  %v2122 = vpop.f32.mrb[0].mxu0
  %v2123 = vadd.f32 0.0, %v2122
  %v2124 = vpop.f32.mrb[0].mxu0
  %2125 = vdwg.mxu0
  %v2126 = vld [vmem:[%s4 + $0x1a] sm:$0x1]
  %v2127 = vld [vmem:[%s4 + $0x1b] sm:$0x7]
  %v2128 = vlaneseq
  %v2129 = vshrl.u32 %v2128, 7
  %v2130 = vsub.s32 0, %v2129
  %v2131 = vrot.slane %v2126, %v2130
  %v2133 = vsel %vm486, %v2123, 0
  %v2136 = vsel %vm486, %v2127, 0
  %2138 = vmatprep.subr.mxu0 0.0
  %2139 = vmatpush1.xpose.msra.mxu0 %v2136
  %2140 = vmatprep.subr.mxu0 0.0
  %2141 = vmatpush1.xpose.msra.mxu0 0.0
  %2142 = vmatprep.subr.mxu0 0.0
  %2143 = vmatpush1.xpose.msra.mxu0 0.0
  %2144 = vmatprep.subr.mxu0 0.0
  %2145 = vmatpush1.xpose.msra.mxu0 0.0
  %2146 = vmatprep.subr.mxu0 0.0
  %2147 = vmatpush1.xpose.msra.mxu0 0.0
  %2148 = vmatprep.subr.mxu0 0.0
  %2149 = vmatpush1.xpose.msra.mxu0 0.0
  %2150 = vmatprep.subr.mxu0 0.0
  %2151 = vmatpush1.xpose.msra.mxu0 0.0
  %2152 = vmatprep.subr.mxu0 0.0
  %2153 = vmatpush1.xpose.msra.mxu0 0.0
  %2154 = vmatprep.subr.mxu0 0.0
  %2155 = vmatpush1.xpose.msra.mxu0 0.0
  %2156 = vmatprep.subr.mxu0 0.0
  %2157 = vmatpush1.xpose.msra.mxu0 0.0
  %2158 = vmatprep.subr.mxu0 0.0
  %2159 = vmatpush1.xpose.msra.mxu0 0.0
  %2160 = vmatprep.subr.mxu0 0.0
  %2161 = vmatpush1.xpose.msra.mxu0 0.0
  %2162 = vmatprep.subr.mxu0 0.0
  %2163 = vmatpush1.xpose.msra.mxu0 0.0
  %2164 = vmatprep.subr.mxu0 0.0
  %2165 = vmatpush1.xpose.msra.mxu0 0.0
  %2166 = vmatprep.subr.mxu0 0.0
  %2167 = vmatpush1.xpose.msra.mxu0 0.0
  %2168 = vmatprep.subr.mxu0 0.0
  %2169 = vmatpush1.xpose.msra.mxu0 0.0
  %2170 = vmatprep.subr.mxu0 0.0
  %2171 = vmatpush1.xpose.msra.mxu0 0.0
  %2172 = vmatprep.subr.mxu0 0.0
  %2173 = vmatpush1.xpose.msra.mxu0 0.0
  %2174 = vmatprep.subr.mxu0 0.0
  %2175 = vmatpush1.xpose.msra.mxu0 0.0
  %2176 = vmatprep.subr.mxu0 0.0
  %2177 = vmatpush1.xpose.msra.mxu0 0.0
  %2178 = vmatprep.subr.mxu0 0.0
  %2179 = vmatpush1.xpose.msra.mxu0 0.0
  %2180 = vmatprep.subr.mxu0 0.0
  %2181 = vmatpush1.xpose.msra.mxu0 0.0
  %2182 = vmatprep.subr.mxu0 0.0
  %2183 = vmatpush1.xpose.msra.mxu0 0.0
  %2184 = vmatprep.subr.mxu0 0.0
  %2185 = vmatpush1.xpose.msra.mxu0 0.0
  %2186 = vmatprep.subr.mxu0 0.0
  %2187 = vmatpush1.xpose.msra.mxu0 0.0
  %2188 = vmatprep.subr.mxu0 0.0
  %2189 = vmatpush1.xpose.msra.mxu0 0.0
  %2190 = vmatprep.subr.mxu0 0.0
  %2191 = vmatpush1.xpose.msra.mxu0 0.0
  %2192 = vmatprep.subr.mxu0 0.0
  %2193 = vmatpush1.xpose.msra.mxu0 0.0
  %2194 = vmatprep.subr.mxu0 0.0
  %2195 = vmatpush1.xpose.msra.mxu0 0.0
  %2196 = vmatprep.subr.mxu0 0.0
  %2197 = vmatpush1.xpose.msra.mxu0 0.0
  %2198 = vmatprep.subr.mxu0 0.0
  %2199 = vmatpush1.xpose.msra.mxu0 0.0
  %2200 = vmatprep.subr.mxu0 0.0
  %2201 = vmatpush1.xpose.msra.mxu0 0.0
  %2202 = vmatprep.mubr.f32.mxu0 0.0
  %2203 = vmatmul.mubr.f32.gmra.mrb[0].mxu0 %v2133
  %v2204 = vpop.f32.mrb[0].mxu0
  %v2205 = vadd.f32 %v2131, %v2204
  %v2206 = vpop.f32.mrb[0].mxu0
  %2207 = vdwg.mxu0
  %v2208 = vsel %vm675, %v2205, -inf
  %2209 = vmax.xlane.f32.xlu0 %v2208
  %v2210 = vpop.xlane.xlu0 %2209
  %v2211 = vsub.f32 %v2205, %v2210
  %v2212 = vmul.f32 %v2211, 1.442695
  %v2213 = vpow.pop %v2212
  %v2214 = vsel %vm675, %v2213, 0.0
  %2215 = vadd.xlane.f32.xlu0 %v2214
  %v2216 = vpop.xlane.xlu0 %2215
  %v2217 = vlog2.pop %v2216
  %v2218 = vmul.f32 %v2217, 0.6931472
  %v2219 = vadd.f32 %v2210, %v2218
  %v2220 = vsub.f32 %v2205, %v2219
  %2221 = vst.msk [vmem:[%s5] sm:$0xff] %vm675, %v2220
  // Predicated region
  $region22: #{gat_forward.1} parent=0 // pred_check
    _
  $region23: #{gat_forward.1} parent=0 // pred_check_branch
    %2223 = sbr.rel (0) target = $region25
  $region24: #{gat_forward.1} parent=0 // pred_region
    _
  $region25: #{gat_forward.1} parent=0 // pred_fallthru
    _
  // Predicated region
  $region26: #{gat_forward.1} parent=0 // pred_check
    _
  $region27: #{gat_forward.1} parent=0 // pred_check_branch
    %2225 = sbr.rel (0) target = $region29
  $region28: #{gat_forward.1} parent=0 // pred_region
    _
  $region29: #{gat_forward.1} parent=0 // pred_fallthru
    _

</llo_original>
